<compile_context>
chip_gen: v5e
topology: v5e:2x2
jax: 0.10.0
libtpu: 0.0.40
codegen_flags: <defaults>
</compile_context>

<pallas_src>
import functools
import math

import jax
import jax.numpy as jnp
from jax import lax
from jax.experimental import pallas as pl
from jax.experimental.pallas import tpu as pltpu

HID = 16            # hidden width (the reference hard-codes 16, ignoring num_hid)
LANES = 1024        # lane width of the batch slab (multiple of 128)
SUBLANES = 8        # rows per in-kernel strip (one f32 vreg is 8 x 128)
MAX_TILE_S = 256    # max sublane rows per grid step (256*1024*4 B = 1 MiB/buffer)

_PI = 3.141592653589793
_HALF_PI = 1.5707963267948966


def _atan2(y, x):
    """Elementwise atan2 on the VPU/EUP: minimax atan on [0,1] + quadrant fixup."""
    ax = jnp.abs(x)
    ay = jnp.abs(y)
    mx = jnp.maximum(ax, ay)
    mn = jnp.minimum(ax, ay)
    a = mn / jnp.where(mx == 0.0, 1.0, mx)          # in [0, 1]; (0,0) -> 0
    s = a * a
    # Minimax coefficients for atan on [-1, 1] (Eigen patan_reduced_float).
    p = -1.62907354533672332763671875e-2 + s * 2.90188402868807315826416015625e-3
    p = 4.3082617223262786865234375e-2 + s * p
    p = -7.5408883392810821533203125e-2 + s * p
    p = 1.066047251224517822265625e-1 + s * p
    p = -1.4209578931331634521484375e-1 + s * p
    p = 1.9993579387664794921875e-1 + s * p
    p = -3.333314359188079833984375e-1 + s * p
    r = a + a * s * p                                # atan(a), a in [0, 1]
    r = jnp.where(ay > ax, _HALF_PI - r, r)          # undo the min/max fold
    r = jnp.where(x < 0.0, _PI - r, r)               # left half-plane
    r = jnp.where(y < 0.0, -r, r)                    # lower half-plane
    return r


def _polarnet_kernel(w1_ref, b1_ref, w2_ref, b2_ref, x0_ref, x1_ref, o_ref,
                     *, bf16_activations):
    # Hoist the tiny parameter table out of the strip loop (SMEM scalar reads).
    w1a = [w1_ref[2 * j] for j in range(HID)]
    w1b = [w1_ref[2 * j + 1] for j in range(HID)]
    b1s = [b1_ref[j] for j in range(HID)]
    w2s = [w2_ref[j] for j in range(HID)]
    b2 = b2_ref[0]

    n_strips = x0_ref.shape[0] // SUBLANES           # static

    def strip(i, carry):
        row = pl.multiple_of(i * SUBLANES, SUBLANES)
        x0 = x0_ref[pl.ds(row, SUBLANES), :]         # (8, LANES) batch-dense vregs
        x1 = x1_ref[pl.ds(row, SUBLANES), :]

        # Fused Cartesian -> polar (mirrors the Python loop in the torch forward).
        r = jnp.sqrt(x0 * x0 + x1 * x1)
        t = _atan2(x1, x0)

        # layer1 (Linear(2,16)) + tanh + layer2 (Linear(16,1)), unrolled over
        # the 16 hidden units as scalar-broadcast MACs (weights are SMEM scalars).
        acc = None
        for j in range(HID):
            z = w1a[j] * r + w1b[j] * t + b1s[j]
            if bf16_activations:                     # v6e/v7x: bf16 EUP ~2x f32
                h = jnp.tanh(z.astype(jnp.bfloat16)).astype(jnp.float32)
            else:
                h = jnp.tanh(z)
            term = w2s[j] * h
            acc = term if acc is None else acc + term
        z_out = acc + b2

        # sigmoid(z) == 0.5 * tanh(0.5 * z) + 0.5  (single EUP push).
        if bf16_activations:
            sz = jnp.tanh((0.5 * z_out).astype(jnp.bfloat16)).astype(jnp.float32)
        else:
            sz = jnp.tanh(0.5 * z_out)
        o_ref[pl.ds(row, SUBLANES), :] = (0.5 * sz + 0.5).astype(o_ref.dtype)
        return carry

    lax.fori_loop(0, n_strips, strip, 0)


def _pick_tiling(s_rows):
    """Choose sublane rows per grid step; returns (tile_s, padded_s_rows)."""
    if s_rows <= SUBLANES:
        return SUBLANES, SUBLANES
    # >= 2 grid steps whenever there is enough work (keeps both v7x TensorCores
    # busy via the "parallel" axis); blocks capped at MAX_TILE_S rows (1 MiB).
    n_steps = max(2, pl.cdiv(s_rows, MAX_TILE_S))
    tile_s = pl.cdiv(pl.cdiv(s_rows, n_steps), SUBLANES) * SUBLANES
    return tile_s, n_steps * tile_s


def polarnet_forward(x, w1, b1, w2, b2, *, bf16_activations=False):
    """Full PolarNet forward.  x: (N, 2) float32 Cartesian points -> (N, 1) probs."""
    x = x.astype(jnp.float32)
    n = x.shape[0]

    # Pad the batch to lane/sublane-dense slabs: N -> (s_rows, LANES).
    s_rows_min = pl.cdiv(n, LANES * SUBLANES) * SUBLANES
    tile_s, s_rows = _pick_tiling(s_rows_min)
    n_pad = s_rows * LANES
    x0 = jnp.pad(x[:, 0], (0, n_pad - n)).reshape(s_rows, LANES)
    x1 = jnp.pad(x[:, 1], (0, n_pad - n)).reshape(s_rows, LANES)

    # Tiny parameters as flat SMEM scalar tables.
    w1_flat = w1.reshape(-1).astype(jnp.float32)   # (32,)  [w[j,0], w[j,1], ...]
    b1_flat = b1.reshape(-1).astype(jnp.float32)   # (16,)
    w2_flat = w2.reshape(-1).astype(jnp.float32)   # (16,)
    b2_flat = b2.reshape(-1).astype(jnp.float32)   # (1,)

    smem_spec = pl.BlockSpec(memory_space=pltpu.MemorySpace.SMEM)
    data_spec = pl.BlockSpec((tile_s, LANES), lambda i: (i, 0))

    kernel = functools.partial(_polarnet_kernel, bf16_activations=bf16_activations)

    out2d = pl.pallas_call(
        kernel,
        out_shape=jax.ShapeDtypeStruct((s_rows, LANES), jnp.float32),
        grid=(s_rows // tile_s,),
        in_specs=[smem_spec, smem_spec, smem_spec, smem_spec,
                  data_spec, data_spec],
        out_specs=pl.BlockSpec((tile_s, LANES), lambda i: (i, 0)),
        compiler_params=pltpu.CompilerParams(
            dimension_semantics=("parallel",)),
        cost_estimate=pl.CostEstimate(
            flops=160 * n_pad,
            transcendentals=19 * n_pad,      # 17 tanh + sqrt + recip per sample
            bytes_accessed=12 * n_pad),      # 2 f32 reads + 1 f32 write
    )(w1_flat, b1_flat, w2_flat, b2_flat, x0, x1)

    return out2d.reshape(n_pad)[:n].reshape(n, 1)


def _reference_forward(x, w1, b1, w2, b2):
    """Pure-JAX reference of the same math, for a correctness check."""
    r = jnp.sqrt(x[:, 0] ** 2 + x[:, 1] ** 2)
    a = jnp.arctan2(x[:, 1], x[:, 0])
    polar = jnp.stack([r, a], axis=-1)
    h = jnp.tanh(polar @ w1.T + b1)
    return jax.nn.sigmoid(h @ w2.T + b2)


if __name__ == "__main__":
    # Deterministic parameter init (same shapes as torch.nn.Linear(2,16)/(16,1);
    # torch's default init is U(-1/sqrt(fan_in), 1/sqrt(fan_in))).
    key = jax.random.PRNGKey(0)
    k_w1, k_b1, k_w2, k_b2, k_x1, k_x2 = jax.random.split(key, 6)

    bound1 = 1.0 / math.sqrt(2.0)
    w1 = jax.random.uniform(k_w1, (16, 2), jnp.float32, -bound1, bound1)  # (out, in)
    b1 = jax.random.uniform(k_b1, (16,), jnp.float32, -bound1, bound1)
    bound2 = 1.0 / math.sqrt(16.0)
    w2 = jax.random.uniform(k_w2, (1, 16), jnp.float32, -bound2, bound2)
    b2 = jax.random.uniform(k_b2, (1,), jnp.float32, -bound2, bound2)

    # Small batch (ragged tail, single grid step).
    xa = jax.random.normal(k_x1, (64, 2), jnp.float32)
    out_a = jax.block_until_ready(polarnet_forward(xa, w1, b1, w2, b2))
    ref_a = jax.block_until_ready(_reference_forward(xa, w1, b1, w2, b2))
    assert out_a.shape == (64, 1) and out_a.dtype == jnp.float32
    assert jnp.allclose(out_a, ref_a, atol=1e-5, rtol=1e-5), \
        float(jnp.max(jnp.abs(out_a - ref_a)))

    # Larger batch: exercises the multi-step grid + adaptive tiling path.
    xb = jax.random.normal(k_x2, (20000, 2), jnp.float32)
    out_b = jax.block_until_ready(polarnet_forward(xb, w1, b1, w2, b2))
    ref_b = jax.block_until_ready(_reference_forward(xb, w1, b1, w2, b2))
    assert out_b.shape == (20000, 1)
    assert jnp.allclose(out_b, ref_b, atol=1e-5, rtol=1e-5), \
        float(jnp.max(jnp.abs(out_b - ref_b)))

    # NOTE: bf16_activations=True is the opt-in fast path for v6e/v7x (EUP runs
    # bf16 ~2x f32); it exceeds the 1e-5 tolerance by design so it is not
    # asserted here.

    print("KERNEL_OK")
</pallas_src>

<mosaic_0001>
module attributes {stable_mosaic.version = 11 : i64} {
  func.func @_polarnet_kernel(%arg0: i32, %arg1: memref<32xf32, #tpu.memory_space<smem>>, %arg2: memref<16xf32, #tpu.memory_space<smem>>, %arg3: memref<16xf32, #tpu.memory_space<smem>>, %arg4: memref<1xf32, #tpu.memory_space<smem>>, %arg5: memref<8x1024xf32, #tpu.memory_space<vmem>>, %arg6: memref<8x1024xf32, #tpu.memory_space<vmem>>, %arg7: memref<8x1024xf32, #tpu.memory_space<vmem>>) attributes {dimension_semantics = [#tpu.dimension_semantics<parallel>], iteration_bounds = array<i64: 1>, scalar_prefetch = 0 : i64, scratch_operands = 0 : i64, tpu.core_type = #tpu.core_type<tc>, window_params = [{transform_indices = @transform_0, window_bounds = array<i64: 32>}, {transform_indices = @transform_1, window_bounds = array<i64: 16>}, {transform_indices = @transform_2, window_bounds = array<i64: 16>}, {transform_indices = @transform_3, window_bounds = array<i64: 1>}, {transform_indices = @transform_4, window_bounds = array<i64: 8, 1024>}, {transform_indices = @transform_5, window_bounds = array<i64: 8, 1024>}, {transform_indices = @transform_6, window_bounds = array<i64: 8, 1024>}]} {
    %c0 = arith.constant 0 : index
    %0 = memref.load %arg1[%c0] : memref<32xf32, #tpu.memory_space<smem>>
    %c2 = arith.constant 2 : index
    %1 = memref.load %arg1[%c2] : memref<32xf32, #tpu.memory_space<smem>>
    %c4 = arith.constant 4 : index
    %2 = memref.load %arg1[%c4] : memref<32xf32, #tpu.memory_space<smem>>
    %c6 = arith.constant 6 : index
    %3 = memref.load %arg1[%c6] : memref<32xf32, #tpu.memory_space<smem>>
    %c8 = arith.constant 8 : index
    %4 = memref.load %arg1[%c8] : memref<32xf32, #tpu.memory_space<smem>>
    %c10 = arith.constant 10 : index
    %5 = memref.load %arg1[%c10] : memref<32xf32, #tpu.memory_space<smem>>
    %c12 = arith.constant 12 : index
    %6 = memref.load %arg1[%c12] : memref<32xf32, #tpu.memory_space<smem>>
    %c14 = arith.constant 14 : index
    %7 = memref.load %arg1[%c14] : memref<32xf32, #tpu.memory_space<smem>>
    %c16 = arith.constant 16 : index
    %8 = memref.load %arg1[%c16] : memref<32xf32, #tpu.memory_space<smem>>
    %c18 = arith.constant 18 : index
    %9 = memref.load %arg1[%c18] : memref<32xf32, #tpu.memory_space<smem>>
    %c20 = arith.constant 20 : index
    %10 = memref.load %arg1[%c20] : memref<32xf32, #tpu.memory_space<smem>>
    %c22 = arith.constant 22 : index
    %11 = memref.load %arg1[%c22] : memref<32xf32, #tpu.memory_space<smem>>
    %c24 = arith.constant 24 : index
    %12 = memref.load %arg1[%c24] : memref<32xf32, #tpu.memory_space<smem>>
    %c26 = arith.constant 26 : index
    %13 = memref.load %arg1[%c26] : memref<32xf32, #tpu.memory_space<smem>>
    %c28 = arith.constant 28 : index
    %14 = memref.load %arg1[%c28] : memref<32xf32, #tpu.memory_space<smem>>
    %c30 = arith.constant 30 : index
    %15 = memref.load %arg1[%c30] : memref<32xf32, #tpu.memory_space<smem>>
    %c1 = arith.constant 1 : index
    %16 = memref.load %arg1[%c1] : memref<32xf32, #tpu.memory_space<smem>>
    %c3 = arith.constant 3 : index
    %17 = memref.load %arg1[%c3] : memref<32xf32, #tpu.memory_space<smem>>
    %c5 = arith.constant 5 : index
    %18 = memref.load %arg1[%c5] : memref<32xf32, #tpu.memory_space<smem>>
    %c7 = arith.constant 7 : index
    %19 = memref.load %arg1[%c7] : memref<32xf32, #tpu.memory_space<smem>>
    %c9 = arith.constant 9 : index
    %20 = memref.load %arg1[%c9] : memref<32xf32, #tpu.memory_space<smem>>
    %c11 = arith.constant 11 : index
    %21 = memref.load %arg1[%c11] : memref<32xf32, #tpu.memory_space<smem>>
    %c13 = arith.constant 13 : index
    %22 = memref.load %arg1[%c13] : memref<32xf32, #tpu.memory_space<smem>>
    %c15 = arith.constant 15 : index
    %23 = memref.load %arg1[%c15] : memref<32xf32, #tpu.memory_space<smem>>
    %c17 = arith.constant 17 : index
    %24 = memref.load %arg1[%c17] : memref<32xf32, #tpu.memory_space<smem>>
    %c19 = arith.constant 19 : index
    %25 = memref.load %arg1[%c19] : memref<32xf32, #tpu.memory_space<smem>>
    %c21 = arith.constant 21 : index
    %26 = memref.load %arg1[%c21] : memref<32xf32, #tpu.memory_space<smem>>
    %c23 = arith.constant 23 : index
    %27 = memref.load %arg1[%c23] : memref<32xf32, #tpu.memory_space<smem>>
    %c25 = arith.constant 25 : index
    %28 = memref.load %arg1[%c25] : memref<32xf32, #tpu.memory_space<smem>>
    %c27 = arith.constant 27 : index
    %29 = memref.load %arg1[%c27] : memref<32xf32, #tpu.memory_space<smem>>
    %c29 = arith.constant 29 : index
    %30 = memref.load %arg1[%c29] : memref<32xf32, #tpu.memory_space<smem>>
    %c31 = arith.constant 31 : index
    %31 = memref.load %arg1[%c31] : memref<32xf32, #tpu.memory_space<smem>>
    %c0_0 = arith.constant 0 : index
    %32 = memref.load %arg2[%c0_0] : memref<16xf32, #tpu.memory_space<smem>>
    %c1_1 = arith.constant 1 : index
    %33 = memref.load %arg2[%c1_1] : memref<16xf32, #tpu.memory_space<smem>>
    %c2_2 = arith.constant 2 : index
    %34 = memref.load %arg2[%c2_2] : memref<16xf32, #tpu.memory_space<smem>>
    %c3_3 = arith.constant 3 : index
    %35 = memref.load %arg2[%c3_3] : memref<16xf32, #tpu.memory_space<smem>>
    %c4_4 = arith.constant 4 : index
    %36 = memref.load %arg2[%c4_4] : memref<16xf32, #tpu.memory_space<smem>>
    %c5_5 = arith.constant 5 : index
    %37 = memref.load %arg2[%c5_5] : memref<16xf32, #tpu.memory_space<smem>>
    %c6_6 = arith.constant 6 : index
    %38 = memref.load %arg2[%c6_6] : memref<16xf32, #tpu.memory_space<smem>>
    %c7_7 = arith.constant 7 : index
    %39 = memref.load %arg2[%c7_7] : memref<16xf32, #tpu.memory_space<smem>>
    %c8_8 = arith.constant 8 : index
    %40 = memref.load %arg2[%c8_8] : memref<16xf32, #tpu.memory_space<smem>>
    %c9_9 = arith.constant 9 : index
    %41 = memref.load %arg2[%c9_9] : memref<16xf32, #tpu.memory_space<smem>>
    %c10_10 = arith.constant 10 : index
    %42 = memref.load %arg2[%c10_10] : memref<16xf32, #tpu.memory_space<smem>>
    %c11_11 = arith.constant 11 : index
    %43 = memref.load %arg2[%c11_11] : memref<16xf32, #tpu.memory_space<smem>>
    %c12_12 = arith.constant 12 : index
    %44 = memref.load %arg2[%c12_12] : memref<16xf32, #tpu.memory_space<smem>>
    %c13_13 = arith.constant 13 : index
    %45 = memref.load %arg2[%c13_13] : memref<16xf32, #tpu.memory_space<smem>>
    %c14_14 = arith.constant 14 : index
    %46 = memref.load %arg2[%c14_14] : memref<16xf32, #tpu.memory_space<smem>>
    %c15_15 = arith.constant 15 : index
    %47 = memref.load %arg2[%c15_15] : memref<16xf32, #tpu.memory_space<smem>>
    %c0_16 = arith.constant 0 : index
    %48 = memref.load %arg3[%c0_16] : memref<16xf32, #tpu.memory_space<smem>>
    %c1_17 = arith.constant 1 : index
    %49 = memref.load %arg3[%c1_17] : memref<16xf32, #tpu.memory_space<smem>>
    %c2_18 = arith.constant 2 : index
    %50 = memref.load %arg3[%c2_18] : memref<16xf32, #tpu.memory_space<smem>>
    %c3_19 = arith.constant 3 : index
    %51 = memref.load %arg3[%c3_19] : memref<16xf32, #tpu.memory_space<smem>>
    %c4_20 = arith.constant 4 : index
    %52 = memref.load %arg3[%c4_20] : memref<16xf32, #tpu.memory_space<smem>>
    %c5_21 = arith.constant 5 : index
    %53 = memref.load %arg3[%c5_21] : memref<16xf32, #tpu.memory_space<smem>>
    %c6_22 = arith.constant 6 : index
    %54 = memref.load %arg3[%c6_22] : memref<16xf32, #tpu.memory_space<smem>>
    %c7_23 = arith.constant 7 : index
    %55 = memref.load %arg3[%c7_23] : memref<16xf32, #tpu.memory_space<smem>>
    %c8_24 = arith.constant 8 : index
    %56 = memref.load %arg3[%c8_24] : memref<16xf32, #tpu.memory_space<smem>>
    %c9_25 = arith.constant 9 : index
    %57 = memref.load %arg3[%c9_25] : memref<16xf32, #tpu.memory_space<smem>>
    %c10_26 = arith.constant 10 : index
    %58 = memref.load %arg3[%c10_26] : memref<16xf32, #tpu.memory_space<smem>>
    %c11_27 = arith.constant 11 : index
    %59 = memref.load %arg3[%c11_27] : memref<16xf32, #tpu.memory_space<smem>>
    %c12_28 = arith.constant 12 : index
    %60 = memref.load %arg3[%c12_28] : memref<16xf32, #tpu.memory_space<smem>>
    %c13_29 = arith.constant 13 : index
    %61 = memref.load %arg3[%c13_29] : memref<16xf32, #tpu.memory_space<smem>>
    %c14_30 = arith.constant 14 : index
    %62 = memref.load %arg3[%c14_30] : memref<16xf32, #tpu.memory_space<smem>>
    %c15_31 = arith.constant 15 : index
    %63 = memref.load %arg3[%c15_31] : memref<16xf32, #tpu.memory_space<smem>>
    %c0_32 = arith.constant 0 : index
    %64 = memref.load %arg4[%c0_32] : memref<1xf32, #tpu.memory_space<smem>>
    %c0_i32 = arith.constant 0 : i32
    %c8_i32 = arith.constant 8 : i32
    %65 = arith.muli %c0_i32, %c8_i32 : i32
    %66 = tpu.assume_multiple %65, 8 : i32
    %67 = arith.index_cast %66 : i32 to index
    %c0_33 = arith.constant 0 : index
    %68 = vector.load %arg5[%67, %c0_33] : memref<8x1024xf32, #tpu.memory_space<vmem>>, vector<8x1024xf32>
    %69 = arith.index_cast %66 : i32 to index
    %c0_34 = arith.constant 0 : index
    %70 = vector.load %arg6[%69, %c0_34] : memref<8x1024xf32, #tpu.memory_space<vmem>>, vector<8x1024xf32>
    %71 = arith.mulf %68, %68 : vector<8x1024xf32>
    %72 = arith.mulf %70, %70 : vector<8x1024xf32>
    %73 = arith.addf %71, %72 : vector<8x1024xf32>
    %74 = math.sqrt %73 : vector<8x1024xf32>
    %75 = math.absf %68 : vector<8x1024xf32>
    %76 = math.absf %70 : vector<8x1024xf32>
    %77 = arith.maximumf %75, %76 : vector<8x1024xf32>
    %78 = arith.minimumf %75, %76 : vector<8x1024xf32>
    %cst = arith.constant 0.000000e+00 : f32
    %79 = vector.broadcast %cst : f32 to vector<8x1024xf32>
    %80 = arith.cmpf oeq, %77, %79 : vector<8x1024xf32>
    %cst_35 = arith.constant 1.000000e+00 : f32
    %81 = vector.broadcast %cst_35 : f32 to vector<8x1024xf32>
    %82 = arith.select %80, %81, %77 : vector<8x1024xi1>, vector<8x1024xf32>
    %83 = arith.divf %78, %82 : vector<8x1024xf32>
    %84 = arith.mulf %83, %83 : vector<8x1024xf32>
    %cst_36 = arith.constant 0.00290188403 : f32
    %85 = vector.broadcast %cst_36 : f32 to vector<8x1024xf32>
    %86 = arith.mulf %84, %85 : vector<8x1024xf32>
    %cst_37 = arith.constant -0.0162907355 : f32
    %87 = vector.broadcast %cst_37 : f32 to vector<8x1024xf32>
    %88 = arith.addf %87, %86 : vector<8x1024xf32>
    %89 = arith.mulf %84, %88 : vector<8x1024xf32>
    %cst_38 = arith.constant 0.0430826172 : f32
    %90 = vector.broadcast %cst_38 : f32 to vector<8x1024xf32>
    %91 = arith.addf %90, %89 : vector<8x1024xf32>
    %92 = arith.mulf %84, %91 : vector<8x1024xf32>
    %cst_39 = arith.constant -0.0754088834 : f32
    %93 = vector.broadcast %cst_39 : f32 to vector<8x1024xf32>
    %94 = arith.addf %93, %92 : vector<8x1024xf32>
    %95 = arith.mulf %84, %94 : vector<8x1024xf32>
    %cst_40 = arith.constant 0.106604725 : f32
    %96 = vector.broadcast %cst_40 : f32 to vector<8x1024xf32>
    %97 = arith.addf %96, %95 : vector<8x1024xf32>
    %98 = arith.mulf %84, %97 : vector<8x1024xf32>
    %cst_41 = arith.constant -0.142095789 : f32
    %99 = vector.broadcast %cst_41 : f32 to vector<8x1024xf32>
    %100 = arith.addf %99, %98 : vector<8x1024xf32>
    %101 = arith.mulf %84, %100 : vector<8x1024xf32>
    %cst_42 = arith.constant 0.199935794 : f32
    %102 = vector.broadcast %cst_42 : f32 to vector<8x1024xf32>
    %103 = arith.addf %102, %101 : vector<8x1024xf32>
    %104 = arith.mulf %84, %103 : vector<8x1024xf32>
    %cst_43 = arith.constant -0.333331436 : f32
    %105 = vector.broadcast %cst_43 : f32 to vector<8x1024xf32>
    %106 = arith.addf %105, %104 : vector<8x1024xf32>
    %107 = arith.mulf %83, %84 : vector<8x1024xf32>
    %108 = arith.mulf %107, %106 : vector<8x1024xf32>
    %109 = arith.addf %83, %108 : vector<8x1024xf32>
    %110 = arith.cmpf ogt, %76, %75 : vector<8x1024xf32>
    %cst_44 = arith.constant 1.57079637 : f32
    %111 = vector.broadcast %cst_44 : f32 to vector<8x1024xf32>
    %112 = arith.subf %111, %109 : vector<8x1024xf32>
    %113 = arith.select %110, %112, %109 : vector<8x1024xi1>, vector<8x1024xf32>
    %cst_45 = arith.constant 0.000000e+00 : f32
    %114 = vector.broadcast %cst_45 : f32 to vector<8x1024xf32>
    %115 = arith.cmpf olt, %68, %114 : vector<8x1024xf32>
    %cst_46 = arith.constant 3.14159274 : f32
    %116 = vector.broadcast %cst_46 : f32 to vector<8x1024xf32>
    %117 = arith.subf %116, %113 : vector<8x1024xf32>
    %118 = arith.select %115, %117, %113 : vector<8x1024xi1>, vector<8x1024xf32>
    %cst_47 = arith.constant 0.000000e+00 : f32
    %119 = vector.broadcast %cst_47 : f32 to vector<8x1024xf32>
    %120 = arith.cmpf olt, %70, %119 : vector<8x1024xf32>
    %cst_48 = arith.constant 0.000000e+00 : f32
    %121 = vector.broadcast %cst_48 : f32 to vector<8x1024xf32>
    %122 = arith.subf %121, %118 : vector<8x1024xf32>
    %123 = arith.select %120, %122, %118 : vector<8x1024xi1>, vector<8x1024xf32>
    %124 = vector.broadcast %0 : f32 to vector<8x1024xf32>
    %125 = arith.mulf %124, %74 : vector<8x1024xf32>
    %126 = vector.broadcast %16 : f32 to vector<8x1024xf32>
    %127 = arith.mulf %126, %123 : vector<8x1024xf32>
    %128 = arith.addf %125, %127 : vector<8x1024xf32>
    %129 = vector.broadcast %32 : f32 to vector<8x1024xf32>
    %130 = arith.addf %128, %129 : vector<8x1024xf32>
    %131 = math.tanh %130 : vector<8x1024xf32>
    %132 = vector.broadcast %48 : f32 to vector<8x1024xf32>
    %133 = arith.mulf %132, %131 : vector<8x1024xf32>
    %134 = vector.broadcast %1 : f32 to vector<8x1024xf32>
    %135 = arith.mulf %134, %74 : vector<8x1024xf32>
    %136 = vector.broadcast %17 : f32 to vector<8x1024xf32>
    %137 = arith.mulf %136, %123 : vector<8x1024xf32>
    %138 = arith.addf %135, %137 : vector<8x1024xf32>
    %139 = vector.broadcast %33 : f32 to vector<8x1024xf32>
    %140 = arith.addf %138, %139 : vector<8x1024xf32>
    %141 = math.tanh %140 : vector<8x1024xf32>
    %142 = vector.broadcast %49 : f32 to vector<8x1024xf32>
    %143 = arith.mulf %142, %141 : vector<8x1024xf32>
    %144 = arith.addf %133, %143 : vector<8x1024xf32>
    %145 = vector.broadcast %2 : f32 to vector<8x1024xf32>
    %146 = arith.mulf %145, %74 : vector<8x1024xf32>
    %147 = vector.broadcast %18 : f32 to vector<8x1024xf32>
    %148 = arith.mulf %147, %123 : vector<8x1024xf32>
    %149 = arith.addf %146, %148 : vector<8x1024xf32>
    %150 = vector.broadcast %34 : f32 to vector<8x1024xf32>
    %151 = arith.addf %149, %150 : vector<8x1024xf32>
    %152 = math.tanh %151 : vector<8x1024xf32>
    %153 = vector.broadcast %50 : f32 to vector<8x1024xf32>
    %154 = arith.mulf %153, %152 : vector<8x1024xf32>
    %155 = arith.addf %144, %154 : vector<8x1024xf32>
    %156 = vector.broadcast %3 : f32 to vector<8x1024xf32>
    %157 = arith.mulf %156, %74 : vector<8x1024xf32>
    %158 = vector.broadcast %19 : f32 to vector<8x1024xf32>
    %159 = arith.mulf %158, %123 : vector<8x1024xf32>
    %160 = arith.addf %157, %159 : vector<8x1024xf32>
    %161 = vector.broadcast %35 : f32 to vector<8x1024xf32>
    %162 = arith.addf %160, %161 : vector<8x1024xf32>
    %163 = math.tanh %162 : vector<8x1024xf32>
    %164 = vector.broadcast %51 : f32 to vector<8x1024xf32>
    %165 = arith.mulf %164, %163 : vector<8x1024xf32>
    %166 = arith.addf %155, %165 : vector<8x1024xf32>
    %167 = vector.broadcast %4 : f32 to vector<8x1024xf32>
    %168 = arith.mulf %167, %74 : vector<8x1024xf32>
    %169 = vector.broadcast %20 : f32 to vector<8x1024xf32>
    %170 = arith.mulf %169, %123 : vector<8x1024xf32>
    %171 = arith.addf %168, %170 : vector<8x1024xf32>
    %172 = vector.broadcast %36 : f32 to vector<8x1024xf32>
    %173 = arith.addf %171, %172 : vector<8x1024xf32>
    %174 = math.tanh %173 : vector<8x1024xf32>
    %175 = vector.broadcast %52 : f32 to vector<8x1024xf32>
    %176 = arith.mulf %175, %174 : vector<8x1024xf32>
    %177 = arith.addf %166, %176 : vector<8x1024xf32>
    %178 = vector.broadcast %5 : f32 to vector<8x1024xf32>
    %179 = arith.mulf %178, %74 : vector<8x1024xf32>
    %180 = vector.broadcast %21 : f32 to vector<8x1024xf32>
    %181 = arith.mulf %180, %123 : vector<8x1024xf32>
    %182 = arith.addf %179, %181 : vector<8x1024xf32>
    %183 = vector.broadcast %37 : f32 to vector<8x1024xf32>
    %184 = arith.addf %182, %183 : vector<8x1024xf32>
    %185 = math.tanh %184 : vector<8x1024xf32>
    %186 = vector.broadcast %53 : f32 to vector<8x1024xf32>
    %187 = arith.mulf %186, %185 : vector<8x1024xf32>
    %188 = arith.addf %177, %187 : vector<8x1024xf32>
    %189 = vector.broadcast %6 : f32 to vector<8x1024xf32>
    %190 = arith.mulf %189, %74 : vector<8x1024xf32>
    %191 = vector.broadcast %22 : f32 to vector<8x1024xf32>
    %192 = arith.mulf %191, %123 : vector<8x1024xf32>
    %193 = arith.addf %190, %192 : vector<8x1024xf32>
    %194 = vector.broadcast %38 : f32 to vector<8x1024xf32>
    %195 = arith.addf %193, %194 : vector<8x1024xf32>
    %196 = math.tanh %195 : vector<8x1024xf32>
    %197 = vector.broadcast %54 : f32 to vector<8x1024xf32>
    %198 = arith.mulf %197, %196 : vector<8x1024xf32>
    %199 = arith.addf %188, %198 : vector<8x1024xf32>
    %200 = vector.broadcast %7 : f32 to vector<8x1024xf32>
    %201 = arith.mulf %200, %74 : vector<8x1024xf32>
    %202 = vector.broadcast %23 : f32 to vector<8x1024xf32>
    %203 = arith.mulf %202, %123 : vector<8x1024xf32>
    %204 = arith.addf %201, %203 : vector<8x1024xf32>
    %205 = vector.broadcast %39 : f32 to vector<8x1024xf32>
    %206 = arith.addf %204, %205 : vector<8x1024xf32>
    %207 = math.tanh %206 : vector<8x1024xf32>
    %208 = vector.broadcast %55 : f32 to vector<8x1024xf32>
    %209 = arith.mulf %208, %207 : vector<8x1024xf32>
    %210 = arith.addf %199, %209 : vector<8x1024xf32>
    %211 = vector.broadcast %8 : f32 to vector<8x1024xf32>
    %212 = arith.mulf %211, %74 : vector<8x1024xf32>
    %213 = vector.broadcast %24 : f32 to vector<8x1024xf32>
    %214 = arith.mulf %213, %123 : vector<8x1024xf32>
    %215 = arith.addf %212, %214 : vector<8x1024xf32>
    %216 = vector.broadcast %40 : f32 to vector<8x1024xf32>
    %217 = arith.addf %215, %216 : vector<8x1024xf32>
    %218 = math.tanh %217 : vector<8x1024xf32>
    %219 = vector.broadcast %56 : f32 to vector<8x1024xf32>
    %220 = arith.mulf %219, %218 : vector<8x1024xf32>
    %221 = arith.addf %210, %220 : vector<8x1024xf32>
    %222 = vector.broadcast %9 : f32 to vector<8x1024xf32>
    %223 = arith.mulf %222, %74 : vector<8x1024xf32>
    %224 = vector.broadcast %25 : f32 to vector<8x1024xf32>
    %225 = arith.mulf %224, %123 : vector<8x1024xf32>
    %226 = arith.addf %223, %225 : vector<8x1024xf32>
    %227 = vector.broadcast %41 : f32 to vector<8x1024xf32>
    %228 = arith.addf %226, %227 : vector<8x1024xf32>
    %229 = math.tanh %228 : vector<8x1024xf32>
    %230 = vector.broadcast %57 : f32 to vector<8x1024xf32>
    %231 = arith.mulf %230, %229 : vector<8x1024xf32>
    %232 = arith.addf %221, %231 : vector<8x1024xf32>
    %233 = vector.broadcast %10 : f32 to vector<8x1024xf32>
    %234 = arith.mulf %233, %74 : vector<8x1024xf32>
    %235 = vector.broadcast %26 : f32 to vector<8x1024xf32>
    %236 = arith.mulf %235, %123 : vector<8x1024xf32>
    %237 = arith.addf %234, %236 : vector<8x1024xf32>
    %238 = vector.broadcast %42 : f32 to vector<8x1024xf32>
    %239 = arith.addf %237, %238 : vector<8x1024xf32>
    %240 = math.tanh %239 : vector<8x1024xf32>
    %241 = vector.broadcast %58 : f32 to vector<8x1024xf32>
    %242 = arith.mulf %241, %240 : vector<8x1024xf32>
    %243 = arith.addf %232, %242 : vector<8x1024xf32>
    %244 = vector.broadcast %11 : f32 to vector<8x1024xf32>
    %245 = arith.mulf %244, %74 : vector<8x1024xf32>
    %246 = vector.broadcast %27 : f32 to vector<8x1024xf32>
    %247 = arith.mulf %246, %123 : vector<8x1024xf32>
    %248 = arith.addf %245, %247 : vector<8x1024xf32>
    %249 = vector.broadcast %43 : f32 to vector<8x1024xf32>
    %250 = arith.addf %248, %249 : vector<8x1024xf32>
    %251 = math.tanh %250 : vector<8x1024xf32>
    %252 = vector.broadcast %59 : f32 to vector<8x1024xf32>
    %253 = arith.mulf %252, %251 : vector<8x1024xf32>
    %254 = arith.addf %243, %253 : vector<8x1024xf32>
    %255 = vector.broadcast %12 : f32 to vector<8x1024xf32>
    %256 = arith.mulf %255, %74 : vector<8x1024xf32>
    %257 = vector.broadcast %28 : f32 to vector<8x1024xf32>
    %258 = arith.mulf %257, %123 : vector<8x1024xf32>
    %259 = arith.addf %256, %258 : vector<8x1024xf32>
    %260 = vector.broadcast %44 : f32 to vector<8x1024xf32>
    %261 = arith.addf %259, %260 : vector<8x1024xf32>
    %262 = math.tanh %261 : vector<8x1024xf32>
    %263 = vector.broadcast %60 : f32 to vector<8x1024xf32>
    %264 = arith.mulf %263, %262 : vector<8x1024xf32>
    %265 = arith.addf %254, %264 : vector<8x1024xf32>
    %266 = vector.broadcast %13 : f32 to vector<8x1024xf32>
    %267 = arith.mulf %266, %74 : vector<8x1024xf32>
    %268 = vector.broadcast %29 : f32 to vector<8x1024xf32>
    %269 = arith.mulf %268, %123 : vector<8x1024xf32>
    %270 = arith.addf %267, %269 : vector<8x1024xf32>
    %271 = vector.broadcast %45 : f32 to vector<8x1024xf32>
    %272 = arith.addf %270, %271 : vector<8x1024xf32>
    %273 = math.tanh %272 : vector<8x1024xf32>
    %274 = vector.broadcast %61 : f32 to vector<8x1024xf32>
    %275 = arith.mulf %274, %273 : vector<8x1024xf32>
    %276 = arith.addf %265, %275 : vector<8x1024xf32>
    %277 = vector.broadcast %14 : f32 to vector<8x1024xf32>
    %278 = arith.mulf %277, %74 : vector<8x1024xf32>
    %279 = vector.broadcast %30 : f32 to vector<8x1024xf32>
    %280 = arith.mulf %279, %123 : vector<8x1024xf32>
    %281 = arith.addf %278, %280 : vector<8x1024xf32>
    %282 = vector.broadcast %46 : f32 to vector<8x1024xf32>
    %283 = arith.addf %281, %282 : vector<8x1024xf32>
    %284 = math.tanh %283 : vector<8x1024xf32>
    %285 = vector.broadcast %62 : f32 to vector<8x1024xf32>
    %286 = arith.mulf %285, %284 : vector<8x1024xf32>
    %287 = arith.addf %276, %286 : vector<8x1024xf32>
    %288 = vector.broadcast %15 : f32 to vector<8x1024xf32>
    %289 = arith.mulf %288, %74 : vector<8x1024xf32>
    %290 = vector.broadcast %31 : f32 to vector<8x1024xf32>
    %291 = arith.mulf %290, %123 : vector<8x1024xf32>
    %292 = arith.addf %289, %291 : vector<8x1024xf32>
    %293 = vector.broadcast %47 : f32 to vector<8x1024xf32>
    %294 = arith.addf %292, %293 : vector<8x1024xf32>
    %295 = math.tanh %294 : vector<8x1024xf32>
    %296 = vector.broadcast %63 : f32 to vector<8x1024xf32>
    %297 = arith.mulf %296, %295 : vector<8x1024xf32>
    %298 = arith.addf %287, %297 : vector<8x1024xf32>
    %299 = vector.broadcast %64 : f32 to vector<8x1024xf32>
    %300 = arith.addf %298, %299 : vector<8x1024xf32>
    %cst_49 = arith.constant 5.000000e-01 : f32
    %301 = vector.broadcast %cst_49 : f32 to vector<8x1024xf32>
    %302 = arith.mulf %301, %300 : vector<8x1024xf32>
    %303 = math.tanh %302 : vector<8x1024xf32>
    %cst_50 = arith.constant 5.000000e-01 : f32
    %304 = vector.broadcast %cst_50 : f32 to vector<8x1024xf32>
    %305 = arith.mulf %304, %303 : vector<8x1024xf32>
    %cst_51 = arith.constant 5.000000e-01 : f32
    %306 = vector.broadcast %cst_51 : f32 to vector<8x1024xf32>
    %307 = arith.addf %305, %306 : vector<8x1024xf32>
    %308 = arith.index_cast %66 : i32 to index
    %c0_52 = arith.constant 0 : index
    %309 = vector.load %arg7[%308, %c0_52] : memref<8x1024xf32, #tpu.memory_space<vmem>>, vector<8x1024xf32>
    tpu.vector_store %arg7[%308, %c0_52], %307 {strides = array<i32>} : memref<8x1024xf32, #tpu.memory_space<vmem>>, vector<8x1024xf32>,
    %c1_i32 = arith.constant 1 : i32
    return
  }
  func.func @transform_0(%arg0: i32) -> i32 {
    %c0_i32 = arith.constant 0 : i32
    %c0_i32_0 = arith.constant 0 : i32
    return %c0_i32 : i32
  }
  func.func @transform_1(%arg0: i32) -> i32 {
    %c0_i32 = arith.constant 0 : i32
    %c0_i32_0 = arith.constant 0 : i32
    return %c0_i32 : i32
  }
  func.func @transform_2(%arg0: i32) -> i32 {
    %c0_i32 = arith.constant 0 : i32
    %c0_i32_0 = arith.constant 0 : i32
    return %c0_i32 : i32
  }
  func.func @transform_3(%arg0: i32) -> i32 {
    %c0_i32 = arith.constant 0 : i32
    %c0_i32_0 = arith.constant 0 : i32
    return %c0_i32 : i32
  }
  func.func @transform_4(%arg0: i32) -> (i32, i32) {
    %c0_i32 = arith.constant 0 : i32
    %c0_i32_0 = arith.constant 0 : i32
    return %arg0, %c0_i32 : i32, i32
  }
  func.func @transform_5(%arg0: i32) -> (i32, i32) {
    %c0_i32 = arith.constant 0 : i32
    %c0_i32_0 = arith.constant 0 : i32
    return %arg0, %c0_i32 : i32, i32
  }
  func.func @transform_6(%arg0: i32) -> (i32, i32) {
    %c0_i32 = arith.constant 0 : i32
    %c0_i32_0 = arith.constant 0 : i32
    return %arg0, %c0_i32 : i32, i32
  }
}

</mosaic_0001>

<llo_original>
// kernel: tpu_custom_call.1
$region0: #{tpu_custom_call.1}
  #allocation0 [shape = 'u32[]', space=smem, size = 0x4, offset = 0x4, fixed_abs, tag = 'smem constant byte address 0x4 - core index']
  #allocation1 [shape = 'u32[72,128]{1,0:T(1,128)}', space=vmem, size = 0x9000, scoped, tag = 'internal scratch']
  #allocation2 [shape = 'f32[1]{0:T(128)S(6)}', space=smem, size = 0x200, scoped, tag = 'scoped memory for tpu_custom_call.1']
  %s0 = inlined_call_operand.vmem [shape: f32[32], index: 0, kind: input, shape index: {}]
  %s1 = inlined_call_operand.vmem [shape: f32[16], index: 1, kind: input, shape index: {}]
  %s2 = inlined_call_operand.vmem [shape: f32[16], index: 2, kind: input, shape index: {}]
  %s3 = inlined_call_operand.<no memory space> [shape: f32[1], index: 3, kind: input, shape index: {}]
  %s4 = inlined_call_operand.hbm [shape: f32[8,1024], index: 4, kind: input, shape index: {}]
  %s5 = inlined_call_operand.hbm [shape: f32[8,1024], index: 5, kind: input, shape index: {}]
  %s6 = inlined_call_operand.hbm [shape: f32[8,1024], index: 6, kind: output, shape index: {}]
  %s7 = sld [smem:[#allocation0]]
  $region54: #{tpu_custom_call.1} parent=0
    _
  %s9 = ssub.s32 1, %s7
  %s10 = scalar_select 0, %s9, %s7
  %11 = sst [smem:[#allocation2]] %s3
  $region1: #{tpu_custom_call.1} parent=0
    #allocation3 [shape = 'u8[512]{0}', space=smem, size = 0x200, scoped, tag = 'input window, operand 0, single buffered']
    #allocation4 [shape = 's32[1]{0}', space=sflag, size = 0x4, scoped, tag = 'scoped memory for tpu_custom_call.1']
    #allocation5 [shape = 's32[1]{0}', space=sflag, size = 0x4, scoped, tag = 'scoped memory for tpu_custom_call.1']
    #allocation6 [shape = 's32[1]{0}', space=sflag, size = 0x4, scoped, tag = 'scoped memory for tpu_custom_call.1']
    #allocation7 [shape = 'u8[512]{0}', space=smem, size = 0x200, scoped, tag = 'input window, operand 1, single buffered']
    #allocation8 [shape = 's32[1]{0}', space=sflag, size = 0x4, scoped, tag = 'scoped memory for tpu_custom_call.1']
    #allocation9 [shape = 'u8[512]{0}', space=smem, size = 0x200, scoped, tag = 'input window, operand 2, single buffered']
    #allocation10 [shape = 'u8[32768]{0}', space=vmem, size = 0x8000, scoped, tag = 'input window, operand 4, single buffered']
    #allocation11 [shape = 'u8[32768]{0}', space=vmem, size = 0x8000, scoped, tag = 'input window, operand 5, single buffered']
    #allocation12 [shape = 's32[1]{0}', space=sflag, size = 0x4, scoped, tag = 'scoped memory for tpu_custom_call.1']
    #allocation13 [shape = 'u8[32768]{0}', space=vmem, size = 0x8000, scoped, tag = 'output window, operand 0, single buffered']
    %12 = vsyncpa [#allocation6], 0
    %13 = vsyncpa [#allocation8], 0
    %14 = vsyncpa [#allocation4], 0
    %15 = vsyncpa [#allocation12], 0
    %16 = vsyncpa [#allocation5], 0
    // Predicated region
    $region2: #{tpu_custom_call.1} parent=1 // pred_check
      _
    $region3: #{tpu_custom_call.1} parent=1 // pred_check_branch
      %18 = sbr.rel (0) target = $region5
    $region4: #{tpu_custom_call.1} parent=1 // pred_region
      %20 = vsyncadd [#allocation6], 0
      %s22 = sshll.u32 %s0, 4
      %s23 = int_to_ptr.vmem [resolvable:$true] %s22
      %25 = dma.vmem_to_smem %s23, 16, [#allocation3], [#allocation6]
    $region5: #{tpu_custom_call.1} parent=1 // pred_fallthru
      _
    // Predicated region
    $region6: #{tpu_custom_call.1} parent=1 // pred_check
      _
    $region7: #{tpu_custom_call.1} parent=1 // pred_check_branch
      %27 = sbr.rel (0) target = $region9
    $region8: #{tpu_custom_call.1} parent=1 // pred_region
      %29 = vsyncadd [#allocation8], 0
      %s31 = sshll.u32 %s1, 4
      %s32 = int_to_ptr.vmem [resolvable:$true] %s31
      %34 = dma.vmem_to_smem %s32, 16, [#allocation7], [#allocation8]
    $region9: #{tpu_custom_call.1} parent=1 // pred_fallthru
      _
    // Predicated region
    $region10: #{tpu_custom_call.1} parent=1 // pred_check
      _
    $region11: #{tpu_custom_call.1} parent=1 // pred_check_branch
      %36 = sbr.rel (0) target = $region13
    $region12: #{tpu_custom_call.1} parent=1 // pred_region
      %38 = vsyncadd [#allocation8], 0
      %s40 = sshll.u32 %s2, 4
      %s41 = int_to_ptr.vmem [resolvable:$true] %s40
      %43 = dma.vmem_to_smem %s41, 16, [#allocation9], [#allocation8]
    $region13: #{tpu_custom_call.1} parent=1 // pred_fallthru
      _
    // Predicated region
    $region14: #{tpu_custom_call.1} parent=1 // pred_check
      _
    $region15: #{tpu_custom_call.1} parent=1 // pred_check_branch
      %45 = sbr.rel (0) target = $region17
    $region16: #{tpu_custom_call.1} parent=1 // pred_region
      _
    $region17: #{tpu_custom_call.1} parent=1 // pred_fallthru
      _
    // Predicated region
    $region18: #{tpu_custom_call.1} parent=1 // pred_check
      _
    $region19: #{tpu_custom_call.1} parent=1 // pred_check_branch
      %47 = sbr.rel (0) target = $region21
    $region20: #{tpu_custom_call.1} parent=1 // pred_region
      %49 = vsyncadd [#allocation4], 0
      %s51 = sshll.u32 %s4, 4
      %s52 = int_to_ptr.hbm [resolvable:$true] %s51
      %s53 = sshll.u32 [#allocation10], 4
      %s54 = int_to_ptr.vmem [resolvable:$true] %s53
      %56 = dma.hbm_to_vmem [thread:$0]  %s52, 1024, %s54, [#allocation4]
    $region21: #{tpu_custom_call.1} parent=1 // pred_fallthru
      _
    // Predicated region
    $region22: #{tpu_custom_call.1} parent=1 // pred_check
      _
    $region23: #{tpu_custom_call.1} parent=1 // pred_check_branch
      %58 = sbr.rel (0) target = $region25
    $region24: #{tpu_custom_call.1} parent=1 // pred_region
      %60 = vsyncadd [#allocation12], 0
      %s62 = sshll.u32 %s5, 4
      %s63 = int_to_ptr.hbm [resolvable:$true] %s62
      %s64 = sshll.u32 [#allocation11], 4
      %s65 = int_to_ptr.vmem [resolvable:$true] %s64
      %67 = dma.hbm_to_vmem [thread:$0]  %s63, 1024, %s65, [#allocation12]
    $region25: #{tpu_custom_call.1} parent=1 // pred_fallthru
      _
    // Predicated region
    $region26: #{tpu_custom_call.1} parent=1 // pred_check
      _
    $region27: #{tpu_custom_call.1} parent=1 // pred_check_branch
      %69 = sbr.rel (0) target = $region29
    $region28: #{tpu_custom_call.1} parent=1 // pred_region
      %71 = dma.done [#allocation6], 16
    $region29: #{tpu_custom_call.1} parent=1 // pred_fallthru
      _
    // Predicated region
    $region30: #{tpu_custom_call.1} parent=1 // pred_check
      _
    $region31: #{tpu_custom_call.1} parent=1 // pred_check_branch
      %73 = sbr.rel (0) target = $region33
    $region32: #{tpu_custom_call.1} parent=1 // pred_region
      %75 = dma.done [#allocation8], 16
    $region33: #{tpu_custom_call.1} parent=1 // pred_fallthru
      _
    // Predicated region
    $region34: #{tpu_custom_call.1} parent=1 // pred_check
      _
    $region35: #{tpu_custom_call.1} parent=1 // pred_check_branch
      %77 = sbr.rel (0) target = $region37
    $region36: #{tpu_custom_call.1} parent=1 // pred_region
      %79 = dma.done [#allocation8], 16
    $region37: #{tpu_custom_call.1} parent=1 // pred_fallthru
      _
    // Predicated region
    $region38: #{tpu_custom_call.1} parent=1 // pred_check
      _
    $region39: #{tpu_custom_call.1} parent=1 // pred_check_branch
      %81 = sbr.rel (0) target = $region41
    $region40: #{tpu_custom_call.1} parent=1 // pred_region
      %83 = dma.done [#allocation4], 1024
    $region41: #{tpu_custom_call.1} parent=1 // pred_fallthru
      _
    // Predicated region
    $region42: #{tpu_custom_call.1} parent=1 // pred_check
      _
    $region43: #{tpu_custom_call.1} parent=1 // pred_check_branch
      %85 = sbr.rel (0) target = $region45
    $region44: #{tpu_custom_call.1} parent=1 // pred_region
      %87 = dma.done [#allocation12], 1024
    $region45: #{tpu_custom_call.1} parent=1 // pred_fallthru
      _
    %88 = sfence
    %s89 = sld [smem:[#allocation3]]
    %s90 = sld [smem:[#allocation3 + $0x2]]
    %s91 = sld [smem:[#allocation3 + $0x4]]
    %s92 = sld [smem:[#allocation3 + $0x6]]
    %s93 = sld [smem:[#allocation3 + $0x8]]
    %s94 = sld [smem:[#allocation3 + $0xa]]
    %s95 = sld [smem:[#allocation3 + $0xc]]
    %s96 = sld [smem:[#allocation3 + $0xe]]
    %s97 = sld [smem:[#allocation3 + $0x10]]
    %s98 = sld [smem:[#allocation3 + $0x12]]
    %s99 = sld [smem:[#allocation3 + $0x14]]
    %s100 = sld [smem:[#allocation3 + $0x16]]
    %s101 = sld [smem:[#allocation3 + $0x18]]
    %s102 = sld [smem:[#allocation3 + $0x1a]]
    %s103 = sld [smem:[#allocation3 + $0x1c]]
    %s104 = sld [smem:[#allocation3 + $0x1e]]
    %s105 = sld [smem:[#allocation3 + $0x1]]
    %s106 = sld [smem:[#allocation3 + $0x3]]
    %s107 = sld [smem:[#allocation3 + $0x5]]
    %s108 = sld [smem:[#allocation3 + $0x7]]
    %s109 = sld [smem:[#allocation3 + $0x9]]
    %s110 = sld [smem:[#allocation3 + $0xb]]
    %s111 = sld [smem:[#allocation3 + $0xd]]
    %s112 = sld [smem:[#allocation3 + $0xf]]
    %s113 = sld [smem:[#allocation3 + $0x11]]
    %s114 = sld [smem:[#allocation3 + $0x13]]
    %s115 = sld [smem:[#allocation3 + $0x15]]
    %s116 = sld [smem:[#allocation3 + $0x17]]
    %s117 = sld [smem:[#allocation3 + $0x19]]
    %s118 = sld [smem:[#allocation3 + $0x1b]]
    %s119 = sld [smem:[#allocation3 + $0x1d]]
    %s120 = sld [smem:[#allocation3 + $0x1f]]
    %s121 = sld [smem:[#allocation7]]
    %s122 = sld [smem:[#allocation7 + $0x1]]
    %s123 = sld [smem:[#allocation7 + $0x2]]
    %s124 = sld [smem:[#allocation7 + $0x3]]
    %s125 = sld [smem:[#allocation7 + $0x4]]
    %s126 = sld [smem:[#allocation7 + $0x5]]
    %s127 = sld [smem:[#allocation7 + $0x6]]
    %s128 = sld [smem:[#allocation7 + $0x7]]
    %s129 = sld [smem:[#allocation7 + $0x8]]
    %s130 = sld [smem:[#allocation7 + $0x9]]
    %s131 = sld [smem:[#allocation7 + $0xa]]
    %s132 = sld [smem:[#allocation7 + $0xb]]
    %s133 = sld [smem:[#allocation7 + $0xc]]
    %s134 = sld [smem:[#allocation7 + $0xd]]
    %s135 = sld [smem:[#allocation7 + $0xe]]
    %s136 = sld [smem:[#allocation7 + $0xf]]
    %s137 = sld [smem:[#allocation9]]
    %s138 = sld [smem:[#allocation9 + $0x1]]
    %s139 = sld [smem:[#allocation9 + $0x2]]
    %s140 = sld [smem:[#allocation9 + $0x3]]
    %s141 = sld [smem:[#allocation9 + $0x4]]
    %s142 = sld [smem:[#allocation9 + $0x5]]
    %s143 = sld [smem:[#allocation9 + $0x6]]
    %s144 = sld [smem:[#allocation9 + $0x7]]
    %s145 = sld [smem:[#allocation9 + $0x8]]
    %s146 = sld [smem:[#allocation9 + $0x9]]
    %s147 = sld [smem:[#allocation9 + $0xa]]
    %s148 = sld [smem:[#allocation9 + $0xb]]
    %s149 = sld [smem:[#allocation9 + $0xc]]
    %s150 = sld [smem:[#allocation9 + $0xd]]
    %s151 = sld [smem:[#allocation9 + $0xe]]
    %s152 = sld [smem:[#allocation9 + $0xf]]
    %s153 = sld [smem:[#allocation2]]
    %s154 = smul.u32 0, 8
    %s155 = smul.addr %s154, 8
    %s156 = scalar_lea.vmem [#allocation10], %s155
    %v157 = vld [vmem:[%s156] sm:$0xff]
    %v158 = vld [vmem:[%s156 + $0x8] sm:$0xff]
    %v159 = vld [vmem:[%s156 + $0x10] sm:$0xff]
    %v160 = vld [vmem:[%s156 + $0x18] sm:$0xff]
    %v161 = vld [vmem:[%s156 + $0x20] sm:$0xff]
    %v162 = vld [vmem:[%s156 + $0x28] sm:$0xff]
    %v163 = vld [vmem:[%s156 + $0x30] sm:$0xff]
    %v164 = vld [vmem:[%s156 + $0x38] sm:$0xff]
    %s165 = smul.addr %s154, 8
    %s166 = scalar_lea.vmem [#allocation11], %s165
    %v167 = vld [vmem:[%s166] sm:$0xff]
    %v168 = vld [vmem:[%s166 + $0x8] sm:$0xff]
    %v169 = vld [vmem:[%s166 + $0x10] sm:$0xff]
    %v170 = vld [vmem:[%s166 + $0x18] sm:$0xff]
    %v171 = vld [vmem:[%s166 + $0x20] sm:$0xff]
    %v172 = vld [vmem:[%s166 + $0x28] sm:$0xff]
    %v173 = vld [vmem:[%s166 + $0x30] sm:$0xff]
    %v174 = vld [vmem:[%s166 + $0x38] sm:$0xff]
    %v175 = vmul.f32 %v157, %v157
    %v176 = vmul.f32 %v158, %v158
    %v177 = vmul.f32 %v159, %v159
    %v178 = vmul.f32 %v160, %v160
    %v179 = vmul.f32 %v161, %v161
    %v180 = vmul.f32 %v162, %v162
    %v181 = vmul.f32 %v163, %v163
    %v182 = vmul.f32 %v164, %v164
    %v183 = vmul.f32 %v167, %v167
    %v184 = vmul.f32 %v168, %v168
    %v185 = vmul.f32 %v169, %v169
    %v186 = vmul.f32 %v170, %v170
    %v187 = vmul.f32 %v171, %v171
    %v188 = vmul.f32 %v172, %v172
    %v189 = vmul.f32 %v173, %v173
    %v190 = vmul.f32 %v174, %v174
    %v191 = vadd.f32 %v175, %v183
    %v192 = vadd.f32 %v176, %v184
    %v193 = vadd.f32 %v177, %v185
    %v194 = vadd.f32 %v178, %v186
    %v195 = vadd.f32 %v179, %v187
    %v196 = vadd.f32 %v180, %v188
    %v197 = vadd.f32 %v181, %v189
    %v198 = vadd.f32 %v182, %v190
    %v199 = vrsqrt.pop %v191
    %v200 = vmul.f32 %v199, %v191
    %v201 = vmul.f32 %v200, %v199
    %v202 = vmul.f32 0.5, %v201
    %v203 = vsub.f32 1.5, %v202
    %v204 = vmul.f32 %v199, %v203
    %v205 = vmul.f32 %v191, %v204
    %vm206 = vcmp.eq.f32.partialorder %v191, inf
    %v207 = vsel %vm206, %v191, %v205
    %vm208 = vcmp.eq.f32.partialorder %v191, 0.0
    %v209 = vand.u32 %v191, 2147483648
    %v210 = vsel %vm208, %v209, %v207
    %v211 = vrsqrt.pop %v192
    %v212 = vmul.f32 %v211, %v192
    %v213 = vmul.f32 %v212, %v211
    %v214 = vmul.f32 0.5, %v213
    %v215 = vsub.f32 1.5, %v214
    %v216 = vmul.f32 %v211, %v215
    %v217 = vmul.f32 %v192, %v216
    %vm218 = vcmp.eq.f32.partialorder %v192, inf
    %v219 = vsel %vm218, %v192, %v217
    %vm220 = vcmp.eq.f32.partialorder %v192, 0.0
    %v221 = vand.u32 %v192, 2147483648
    %v222 = vsel %vm220, %v221, %v219
    %v223 = vrsqrt.pop %v193
    %v224 = vmul.f32 %v223, %v193
    %v225 = vmul.f32 %v224, %v223
    %v226 = vmul.f32 0.5, %v225
    %v227 = vsub.f32 1.5, %v226
    %v228 = vmul.f32 %v223, %v227
    %v229 = vmul.f32 %v193, %v228
    %vm230 = vcmp.eq.f32.partialorder %v193, inf
    %v231 = vsel %vm230, %v193, %v229
    %vm232 = vcmp.eq.f32.partialorder %v193, 0.0
    %v233 = vand.u32 %v193, 2147483648
    %v234 = vsel %vm232, %v233, %v231
    %v235 = vrsqrt.pop %v194
    %v236 = vmul.f32 %v235, %v194
    %v237 = vmul.f32 %v236, %v235
    %v238 = vmul.f32 0.5, %v237
    %v239 = vsub.f32 1.5, %v238
    %v240 = vmul.f32 %v235, %v239
    %v241 = vmul.f32 %v194, %v240
    %vm242 = vcmp.eq.f32.partialorder %v194, inf
    %v243 = vsel %vm242, %v194, %v241
    %vm244 = vcmp.eq.f32.partialorder %v194, 0.0
    %v245 = vand.u32 %v194, 2147483648
    %v246 = vsel %vm244, %v245, %v243
    %v247 = vrsqrt.pop %v195
    %v248 = vmul.f32 %v247, %v195
    %v249 = vmul.f32 %v248, %v247
    %v250 = vmul.f32 0.5, %v249
    %v251 = vsub.f32 1.5, %v250
    %v252 = vmul.f32 %v247, %v251
    %v253 = vmul.f32 %v195, %v252
    %vm254 = vcmp.eq.f32.partialorder %v195, inf
    %v255 = vsel %vm254, %v195, %v253
    %vm256 = vcmp.eq.f32.partialorder %v195, 0.0
    %v257 = vand.u32 %v195, 2147483648
    %v258 = vsel %vm256, %v257, %v255
    %v259 = vrsqrt.pop %v196
    %v260 = vmul.f32 %v259, %v196
    %v261 = vmul.f32 %v260, %v259
    %v262 = vmul.f32 0.5, %v261
    %v263 = vsub.f32 1.5, %v262
    %v264 = vmul.f32 %v259, %v263
    %v265 = vmul.f32 %v196, %v264
    %vm266 = vcmp.eq.f32.partialorder %v196, inf
    %v267 = vsel %vm266, %v196, %v265
    %vm268 = vcmp.eq.f32.partialorder %v196, 0.0
    %v269 = vand.u32 %v196, 2147483648
    %v270 = vsel %vm268, %v269, %v267
    %v271 = vrsqrt.pop %v197
    %v272 = vmul.f32 %v271, %v197
    %v273 = vmul.f32 %v272, %v271
    %v274 = vmul.f32 0.5, %v273
    %v275 = vsub.f32 1.5, %v274
    %v276 = vmul.f32 %v271, %v275
    %v277 = vmul.f32 %v197, %v276
    %vm278 = vcmp.eq.f32.partialorder %v197, inf
    %v279 = vsel %vm278, %v197, %v277
    %vm280 = vcmp.eq.f32.partialorder %v197, 0.0
    %v281 = vand.u32 %v197, 2147483648
    %v282 = vsel %vm280, %v281, %v279
    %v283 = vrsqrt.pop %v198
    %v284 = vmul.f32 %v283, %v198
    %v285 = vmul.f32 %v284, %v283
    %v286 = vmul.f32 0.5, %v285
    %v287 = vsub.f32 1.5, %v286
    %v288 = vmul.f32 %v283, %v287
    %v289 = vmul.f32 %v198, %v288
    %vm290 = vcmp.eq.f32.partialorder %v198, inf
    %v291 = vsel %vm290, %v198, %v289
    %vm292 = vcmp.eq.f32.partialorder %v198, 0.0
    %v293 = vand.u32 %v198, 2147483648
    %v294 = vsel %vm292, %v293, %v291
    %v295 = vand.u32 2147483647, %v157
    %v296 = vand.u32 2147483647, %v158
    %v297 = vand.u32 2147483647, %v159
    %v298 = vand.u32 2147483647, %v160
    %v299 = vand.u32 2147483647, %v161
    %v300 = vand.u32 2147483647, %v162
    %v301 = vand.u32 2147483647, %v163
    %v302 = vand.u32 2147483647, %v164
    %v303 = vand.u32 2147483647, %v167
    %v304 = vand.u32 2147483647, %v168
    %v305 = vand.u32 2147483647, %v169
    %v306 = vand.u32 2147483647, %v170
    %v307 = vand.u32 2147483647, %v171
    %v308 = vand.u32 2147483647, %v172
    %v309 = vand.u32 2147483647, %v173
    %v310 = vand.u32 2147483647, %v174
    %v311 = vmax.f32 %v295, %v303
    %v312 = vmax.f32 %v296, %v304
    %v313 = vmax.f32 %v297, %v305
    %v314 = vmax.f32 %v298, %v306
    %v315 = vmax.f32 %v299, %v307
    %v316 = vmax.f32 %v300, %v308
    %v317 = vmax.f32 %v301, %v309
    %v318 = vmax.f32 %v302, %v310
    %v319 = vmin.f32 %v295, %v303
    %v320 = vmin.f32 %v296, %v304
    %v321 = vmin.f32 %v297, %v305
    %v322 = vmin.f32 %v298, %v306
    %v323 = vmin.f32 %v299, %v307
    %v324 = vmin.f32 %v300, %v308
    %v325 = vmin.f32 %v301, %v309
    %v326 = vmin.f32 %v302, %v310
    %vm327 = vcmp.eq.f32.partialorder %v311, 0.0
    %vm328 = vcmp.eq.f32.partialorder %v312, 0.0
    %vm329 = vcmp.eq.f32.partialorder %v313, 0.0
    %vm330 = vcmp.eq.f32.partialorder %v314, 0.0
    %vm331 = vcmp.eq.f32.partialorder %v315, 0.0
    %vm332 = vcmp.eq.f32.partialorder %v316, 0.0
    %vm333 = vcmp.eq.f32.partialorder %v317, 0.0
    %vm334 = vcmp.eq.f32.partialorder %v318, 0.0
    %v335 = vsel %vm327, 1.0, %v311
    %v336 = vsel %vm328, 1.0, %v312
    %v337 = vsel %vm329, 1.0, %v313
    %v338 = vsel %vm330, 1.0, %v314
    %v339 = vsel %vm331, 1.0, %v315
    %v340 = vsel %vm332, 1.0, %v316
    %v341 = vsel %vm333, 1.0, %v317
    %v342 = vsel %vm334, 1.0, %v318
    %v343 = vrcp.pop %v335
    %v344 = vmul.f32 %v335, %v343
    %v345 = vsub.f32 1.0, %v344
    %v346 = vmul.f32 %v343, %v345
    %v347 = vadd.f32 %v343, %v346
    %vm348 = vweird.f32 %v335
    %vm349 = vweird.f32 %v343
    %vm350 = vmor %vm348, %vm349
    %v351 = vsel %vm350, %v343, %v347
    %v352 = vand.u32 2147483647, %v335
    %vm353 = vcmp.eq.f32.partialorder %v352, 8.507059e+37
    %v354 = vand.u32 %v335, 2147483648
    %v355 = vor.u32 1.1754944e-38, %v354
    %v356 = vsel %vm353, %v355, %v351
    %v357 = vmul.f32 %v319, %v356
    %v358 = vrcp.pop %v336
    %v359 = vmul.f32 %v336, %v358
    %v360 = vsub.f32 1.0, %v359
    %v361 = vmul.f32 %v358, %v360
    %v362 = vadd.f32 %v358, %v361
    %vm363 = vweird.f32 %v336
    %vm364 = vweird.f32 %v358
    %vm365 = vmor %vm363, %vm364
    %v366 = vsel %vm365, %v358, %v362
    %v367 = vand.u32 2147483647, %v336
    %vm368 = vcmp.eq.f32.partialorder %v367, 8.507059e+37
    %v369 = vand.u32 %v336, 2147483648
    %v370 = vor.u32 1.1754944e-38, %v369
    %v371 = vsel %vm368, %v370, %v366
    %v372 = vmul.f32 %v320, %v371
    %v373 = vrcp.pop %v337
    %v374 = vmul.f32 %v337, %v373
    %v375 = vsub.f32 1.0, %v374
    %v376 = vmul.f32 %v373, %v375
    %v377 = vadd.f32 %v373, %v376
    %vm378 = vweird.f32 %v337
    %vm379 = vweird.f32 %v373
    %vm380 = vmor %vm378, %vm379
    %v381 = vsel %vm380, %v373, %v377
    %v382 = vand.u32 2147483647, %v337
    %vm383 = vcmp.eq.f32.partialorder %v382, 8.507059e+37
    %v384 = vand.u32 %v337, 2147483648
    %v385 = vor.u32 1.1754944e-38, %v384
    %v386 = vsel %vm383, %v385, %v381
    %v387 = vmul.f32 %v321, %v386
    %v388 = vrcp.pop %v338
    %v389 = vmul.f32 %v338, %v388
    %v390 = vsub.f32 1.0, %v389
    %v391 = vmul.f32 %v388, %v390
    %v392 = vadd.f32 %v388, %v391
    %vm393 = vweird.f32 %v338
    %vm394 = vweird.f32 %v388
    %vm395 = vmor %vm393, %vm394
    %v396 = vsel %vm395, %v388, %v392
    %v397 = vand.u32 2147483647, %v338
    %vm398 = vcmp.eq.f32.partialorder %v397, 8.507059e+37
    %v399 = vand.u32 %v338, 2147483648
    %v400 = vor.u32 1.1754944e-38, %v399
    %v401 = vsel %vm398, %v400, %v396
    %v402 = vmul.f32 %v322, %v401
    %v403 = vrcp.pop %v339
    %v404 = vmul.f32 %v339, %v403
    %v405 = vsub.f32 1.0, %v404
    %v406 = vmul.f32 %v403, %v405
    %v407 = vadd.f32 %v403, %v406
    %vm408 = vweird.f32 %v339
    %vm409 = vweird.f32 %v403
    %vm410 = vmor %vm408, %vm409
    %v411 = vsel %vm410, %v403, %v407
    %v412 = vand.u32 2147483647, %v339
    %vm413 = vcmp.eq.f32.partialorder %v412, 8.507059e+37
    %v414 = vand.u32 %v339, 2147483648
    %v415 = vor.u32 1.1754944e-38, %v414
    %v416 = vsel %vm413, %v415, %v411
    %v417 = vmul.f32 %v323, %v416
    %v418 = vrcp.pop %v340
    %v419 = vmul.f32 %v340, %v418
    %v420 = vsub.f32 1.0, %v419
    %v421 = vmul.f32 %v418, %v420
    %v422 = vadd.f32 %v418, %v421
    %vm423 = vweird.f32 %v340
    %vm424 = vweird.f32 %v418
    %vm425 = vmor %vm423, %vm424
    %v426 = vsel %vm425, %v418, %v422
    %v427 = vand.u32 2147483647, %v340
    %vm428 = vcmp.eq.f32.partialorder %v427, 8.507059e+37
    %v429 = vand.u32 %v340, 2147483648
    %v430 = vor.u32 1.1754944e-38, %v429
    %v431 = vsel %vm428, %v430, %v426
    %v432 = vmul.f32 %v324, %v431
    %v433 = vrcp.pop %v341
    %v434 = vmul.f32 %v341, %v433
    %v435 = vsub.f32 1.0, %v434
    %v436 = vmul.f32 %v433, %v435
    %v437 = vadd.f32 %v433, %v436
    %vm438 = vweird.f32 %v341
    %vm439 = vweird.f32 %v433
    %vm440 = vmor %vm438, %vm439
    %v441 = vsel %vm440, %v433, %v437
    %v442 = vand.u32 2147483647, %v341
    %vm443 = vcmp.eq.f32.partialorder %v442, 8.507059e+37
    %v444 = vand.u32 %v341, 2147483648
    %v445 = vor.u32 1.1754944e-38, %v444
    %v446 = vsel %vm443, %v445, %v441
    %v447 = vmul.f32 %v325, %v446
    %v448 = vrcp.pop %v342
    %v449 = vmul.f32 %v342, %v448
    %v450 = vsub.f32 1.0, %v449
    %v451 = vmul.f32 %v448, %v450
    %v452 = vadd.f32 %v448, %v451
    %vm453 = vweird.f32 %v342
    %vm454 = vweird.f32 %v448
    %vm455 = vmor %vm453, %vm454
    %v456 = vsel %vm455, %v448, %v452
    %v457 = vand.u32 2147483647, %v342
    %vm458 = vcmp.eq.f32.partialorder %v457, 8.507059e+37
    %v459 = vand.u32 %v342, 2147483648
    %v460 = vor.u32 1.1754944e-38, %v459
    %v461 = vsel %vm458, %v460, %v456
    %v462 = vmul.f32 %v326, %v461
    %v463 = vmul.f32 %v357, %v357
    %v464 = vmul.f32 %v372, %v372
    %v465 = vmul.f32 %v387, %v387
    %v466 = vmul.f32 %v402, %v402
    %v467 = vmul.f32 %v417, %v417
    %v468 = vmul.f32 %v432, %v432
    %v469 = vmul.f32 %v447, %v447
    %v470 = vmul.f32 %v462, %v462
    %v471 = vmul.f32 %v463, 0.002901884
    %v472 = vmul.f32 %v464, 0.002901884
    %v473 = vmul.f32 %v465, 0.002901884
    %v474 = vmul.f32 %v466, 0.002901884
    %v475 = vmul.f32 %v467, 0.002901884
    %v476 = vmul.f32 %v468, 0.002901884
    %v477 = vmul.f32 %v469, 0.002901884
    %v478 = vmul.f32 %v470, 0.002901884
    %v479 = vadd.f32 %v471, -0.016290735
    %v480 = vadd.f32 %v472, -0.016290735
    %v481 = vadd.f32 %v473, -0.016290735
    %v482 = vadd.f32 %v474, -0.016290735
    %v483 = vadd.f32 %v475, -0.016290735
    %v484 = vadd.f32 %v476, -0.016290735
    %v485 = vadd.f32 %v477, -0.016290735
    %v486 = vadd.f32 %v478, -0.016290735
    %v487 = vmul.f32 %v463, %v479
    %v488 = vmul.f32 %v464, %v480
    %v489 = vmul.f32 %v465, %v481
    %v490 = vmul.f32 %v466, %v482
    %v491 = vmul.f32 %v467, %v483
    %v492 = vmul.f32 %v468, %v484
    %v493 = vmul.f32 %v469, %v485
    %v494 = vmul.f32 %v470, %v486
    %v495 = vadd.f32 %v487, 0.043082617
    %v496 = vadd.f32 %v488, 0.043082617
    %v497 = vadd.f32 %v489, 0.043082617
    %v498 = vadd.f32 %v490, 0.043082617
    %v499 = vadd.f32 %v491, 0.043082617
    %v500 = vadd.f32 %v492, 0.043082617
    %v501 = vadd.f32 %v493, 0.043082617
    %v502 = vadd.f32 %v494, 0.043082617
    %v503 = vmul.f32 %v463, %v495
    %v504 = vmul.f32 %v464, %v496
    %v505 = vmul.f32 %v465, %v497
    %v506 = vmul.f32 %v466, %v498
    %v507 = vmul.f32 %v467, %v499
    %v508 = vmul.f32 %v468, %v500
    %v509 = vmul.f32 %v469, %v501
    %v510 = vmul.f32 %v470, %v502
    %v511 = vadd.f32 %v503, -0.07540888
    %v512 = vadd.f32 %v504, -0.07540888
    %v513 = vadd.f32 %v505, -0.07540888
    %v514 = vadd.f32 %v506, -0.07540888
    %v515 = vadd.f32 %v507, -0.07540888
    %v516 = vadd.f32 %v508, -0.07540888
    %v517 = vadd.f32 %v509, -0.07540888
    %v518 = vadd.f32 %v510, -0.07540888
    %v519 = vmul.f32 %v463, %v511
    %v520 = vmul.f32 %v464, %v512
    %v521 = vmul.f32 %v465, %v513
    %v522 = vmul.f32 %v466, %v514
    %v523 = vmul.f32 %v467, %v515
    %v524 = vmul.f32 %v468, %v516
    %v525 = vmul.f32 %v469, %v517
    %v526 = vmul.f32 %v470, %v518
    %v527 = vadd.f32 %v519, 0.106604725
    %v528 = vadd.f32 %v520, 0.106604725
    %v529 = vadd.f32 %v521, 0.106604725
    %v530 = vadd.f32 %v522, 0.106604725
    %v531 = vadd.f32 %v523, 0.106604725
    %v532 = vadd.f32 %v524, 0.106604725
    %v533 = vadd.f32 %v525, 0.106604725
    %v534 = vadd.f32 %v526, 0.106604725
    %v535 = vmul.f32 %v463, %v527
    %v536 = vmul.f32 %v464, %v528
    %v537 = vmul.f32 %v465, %v529
    %v538 = vmul.f32 %v466, %v530
    %v539 = vmul.f32 %v467, %v531
    %v540 = vmul.f32 %v468, %v532
    %v541 = vmul.f32 %v469, %v533
    %v542 = vmul.f32 %v470, %v534
    %v543 = vadd.f32 %v535, -0.14209579
    %v544 = vadd.f32 %v536, -0.14209579
    %v545 = vadd.f32 %v537, -0.14209579
    %v546 = vadd.f32 %v538, -0.14209579
    %v547 = vadd.f32 %v539, -0.14209579
    %v548 = vadd.f32 %v540, -0.14209579
    %v549 = vadd.f32 %v541, -0.14209579
    %v550 = vadd.f32 %v542, -0.14209579
    %v551 = vmul.f32 %v463, %v543
    %v552 = vmul.f32 %v464, %v544
    %v553 = vmul.f32 %v465, %v545
    %v554 = vmul.f32 %v466, %v546
    %v555 = vmul.f32 %v467, %v547
    %v556 = vmul.f32 %v468, %v548
    %v557 = vmul.f32 %v469, %v549
    %v558 = vmul.f32 %v470, %v550
    %v559 = vadd.f32 %v551, 0.1999358
    %v560 = vadd.f32 %v552, 0.1999358
    %v561 = vadd.f32 %v553, 0.1999358
    %v562 = vadd.f32 %v554, 0.1999358
    %v563 = vadd.f32 %v555, 0.1999358
    %v564 = vadd.f32 %v556, 0.1999358
    %v565 = vadd.f32 %v557, 0.1999358
    %v566 = vadd.f32 %v558, 0.1999358
    %v567 = vmul.f32 %v463, %v559
    %v568 = vmul.f32 %v464, %v560
    %v569 = vmul.f32 %v465, %v561
    %v570 = vmul.f32 %v466, %v562
    %v571 = vmul.f32 %v467, %v563
    %v572 = vmul.f32 %v468, %v564
    %v573 = vmul.f32 %v469, %v565
    %v574 = vmul.f32 %v470, %v566
    %v575 = vadd.f32 %v567, -0.33333144
    %v576 = vadd.f32 %v568, -0.33333144
    %v577 = vadd.f32 %v569, -0.33333144
    %v578 = vadd.f32 %v570, -0.33333144
    %v579 = vadd.f32 %v571, -0.33333144
    %v580 = vadd.f32 %v572, -0.33333144
    %v581 = vadd.f32 %v573, -0.33333144
    %v582 = vadd.f32 %v574, -0.33333144
    %v583 = vmul.f32 %v357, %v463
    %v584 = vmul.f32 %v372, %v464
    %v585 = vmul.f32 %v387, %v465
    %v586 = vmul.f32 %v402, %v466
    %v587 = vmul.f32 %v417, %v467
    %v588 = vmul.f32 %v432, %v468
    %v589 = vmul.f32 %v447, %v469
    %v590 = vmul.f32 %v462, %v470
    %v591 = vmul.f32 %v583, %v575
    %v592 = vmul.f32 %v584, %v576
    %v593 = vmul.f32 %v585, %v577
    %v594 = vmul.f32 %v586, %v578
    %v595 = vmul.f32 %v587, %v579
    %v596 = vmul.f32 %v588, %v580
    %v597 = vmul.f32 %v589, %v581
    %v598 = vmul.f32 %v590, %v582
    %v599 = vadd.f32 %v357, %v591
    %v600 = vadd.f32 %v372, %v592
    %v601 = vadd.f32 %v387, %v593
    %v602 = vadd.f32 %v402, %v594
    %v603 = vadd.f32 %v417, %v595
    %v604 = vadd.f32 %v432, %v596
    %v605 = vadd.f32 %v447, %v597
    %v606 = vadd.f32 %v462, %v598
    %vm607 = vcmp.gt.f32.partialorder %v303, %v295
    %vm608 = vcmp.gt.f32.partialorder %v304, %v296
    %vm609 = vcmp.gt.f32.partialorder %v305, %v297
    %vm610 = vcmp.gt.f32.partialorder %v306, %v298
    %vm611 = vcmp.gt.f32.partialorder %v307, %v299
    %vm612 = vcmp.gt.f32.partialorder %v308, %v300
    %vm613 = vcmp.gt.f32.partialorder %v309, %v301
    %vm614 = vcmp.gt.f32.partialorder %v310, %v302
    %v615 = vsub.f32 1.5707964, %v599
    %v616 = vsub.f32 1.5707964, %v600
    %v617 = vsub.f32 1.5707964, %v601
    %v618 = vsub.f32 1.5707964, %v602
    %v619 = vsub.f32 1.5707964, %v603
    %v620 = vsub.f32 1.5707964, %v604
    %v621 = vsub.f32 1.5707964, %v605
    %v622 = vsub.f32 1.5707964, %v606
    %v623 = vsel %vm607, %v615, %v599
    %v624 = vsel %vm608, %v616, %v600
    %v625 = vsel %vm609, %v617, %v601
    %v626 = vsel %vm610, %v618, %v602
    %v627 = vsel %vm611, %v619, %v603
    %v628 = vsel %vm612, %v620, %v604
    %v629 = vsel %vm613, %v621, %v605
    %v630 = vsel %vm614, %v622, %v606
    %vm631 = vcmp.lt.f32.partialorder %v157, 0.0
    %vm632 = vcmp.lt.f32.partialorder %v158, 0.0
    %vm633 = vcmp.lt.f32.partialorder %v159, 0.0
    %vm634 = vcmp.lt.f32.partialorder %v160, 0.0
    %vm635 = vcmp.lt.f32.partialorder %v161, 0.0
    %vm636 = vcmp.lt.f32.partialorder %v162, 0.0
    %vm637 = vcmp.lt.f32.partialorder %v163, 0.0
    %vm638 = vcmp.lt.f32.partialorder %v164, 0.0
    %v639 = vsub.f32 3.1415927, %v623
    %v640 = vsub.f32 3.1415927, %v624
    %v641 = vsub.f32 3.1415927, %v625
    %v642 = vsub.f32 3.1415927, %v626
    %v643 = vsub.f32 3.1415927, %v627
    %v644 = vsub.f32 3.1415927, %v628
    %v645 = vsub.f32 3.1415927, %v629
    %v646 = vsub.f32 3.1415927, %v630
    %v647 = vsel %vm631, %v639, %v623
    %v648 = vsel %vm632, %v640, %v624
    %v649 = vsel %vm633, %v641, %v625
    %v650 = vsel %vm634, %v642, %v626
    %v651 = vsel %vm635, %v643, %v627
    %v652 = vsel %vm636, %v644, %v628
    %v653 = vsel %vm637, %v645, %v629
    %v654 = vsel %vm638, %v646, %v630
    %vm655 = vcmp.lt.f32.partialorder %v167, 0.0
    %vm656 = vcmp.lt.f32.partialorder %v168, 0.0
    %vm657 = vcmp.lt.f32.partialorder %v169, 0.0
    %vm658 = vcmp.lt.f32.partialorder %v170, 0.0
    %vm659 = vcmp.lt.f32.partialorder %v171, 0.0
    %vm660 = vcmp.lt.f32.partialorder %v172, 0.0
    %vm661 = vcmp.lt.f32.partialorder %v173, 0.0
    %vm662 = vcmp.lt.f32.partialorder %v174, 0.0
    %v663 = vsub.f32 0.0, %v647
    %v664 = vsub.f32 0.0, %v648
    %v665 = vsub.f32 0.0, %v649
    %v666 = vsub.f32 0.0, %v650
    %v667 = vsub.f32 0.0, %v651
    %v668 = vsub.f32 0.0, %v652
    %v669 = vsub.f32 0.0, %v653
    %v670 = vsub.f32 0.0, %v654
    %v671 = vsel %vm655, %v663, %v647
    %v672 = vsel %vm656, %v664, %v648
    %v673 = vsel %vm657, %v665, %v649
    %v674 = vsel %vm658, %v666, %v650
    %v675 = vsel %vm659, %v667, %v651
    %v676 = vsel %vm660, %v668, %v652
    %v677 = vsel %vm661, %v669, %v653
    %v678 = vsel %vm662, %v670, %v654
    %v679 = vstv %s89
    %v680 = vmul.f32 %v679, %v210
    %v681 = vmul.f32 %v679, %v222
    %v682 = vmul.f32 %v679, %v234
    %v683 = vmul.f32 %v679, %v246
    %v684 = vmul.f32 %v679, %v258
    %v685 = vmul.f32 %v679, %v270
    %v686 = vmul.f32 %v679, %v282
    %v687 = vmul.f32 %v679, %v294
    %v688 = vstv %s105
    %v689 = vmul.f32 %v688, %v671
    %v690 = vmul.f32 %v688, %v672
    %v691 = vmul.f32 %v688, %v673
    %v692 = vmul.f32 %v688, %v674
    %v693 = vmul.f32 %v688, %v675
    %v694 = vmul.f32 %v688, %v676
    %v695 = vmul.f32 %v688, %v677
    %v696 = vmul.f32 %v688, %v678
    %v697 = vadd.f32 %v680, %v689
    %v698 = vadd.f32 %v681, %v690
    %v699 = vadd.f32 %v682, %v691
    %v700 = vadd.f32 %v683, %v692
    %v701 = vadd.f32 %v684, %v693
    %v702 = vadd.f32 %v685, %v694
    %v703 = vadd.f32 %v686, %v695
    %v704 = vadd.f32 %v687, %v696
    %v705 = vstv %s121
    %v706 = vadd.f32 %v697, %v705
    %v707 = vadd.f32 %v698, %v705
    %v708 = vadd.f32 %v699, %v705
    %v709 = vadd.f32 %v700, %v705
    %v710 = vadd.f32 %v701, %v705
    %v711 = vadd.f32 %v702, %v705
    %v712 = vadd.f32 %v703, %v705
    %v713 = vadd.f32 %v704, %v705
    %v714 = vtanh.pop %v706
    %v715 = vtanh.pop %v707
    %v716 = vtanh.pop %v708
    %v717 = vtanh.pop %v709
    %v718 = vtanh.pop %v710
    %v719 = vtanh.pop %v711
    %v720 = vtanh.pop %v712
    %v721 = vtanh.pop %v713
    %v722 = vstv %s137
    %v723 = vmul.f32 %v722, %v714
    %v724 = vmul.f32 %v722, %v715
    %v725 = vmul.f32 %v722, %v716
    %v726 = vmul.f32 %v722, %v717
    %v727 = vmul.f32 %v722, %v718
    %v728 = vmul.f32 %v722, %v719
    %v729 = vmul.f32 %v722, %v720
    %v730 = vmul.f32 %v722, %v721
    %v731 = vstv %s90
    %v732 = vmul.f32 %v731, %v210
    %v733 = vmul.f32 %v731, %v222
    %v734 = vmul.f32 %v731, %v234
    %v735 = vmul.f32 %v731, %v246
    %v736 = vmul.f32 %v731, %v258
    %v737 = vmul.f32 %v731, %v270
    %v738 = vmul.f32 %v731, %v282
    %v739 = vmul.f32 %v731, %v294
    %v740 = vstv %s106
    %v741 = vmul.f32 %v740, %v671
    %v742 = vmul.f32 %v740, %v672
    %v743 = vmul.f32 %v740, %v673
    %v744 = vmul.f32 %v740, %v674
    %v745 = vmul.f32 %v740, %v675
    %v746 = vmul.f32 %v740, %v676
    %v747 = vmul.f32 %v740, %v677
    %v748 = vmul.f32 %v740, %v678
    %v749 = vadd.f32 %v732, %v741
    %v750 = vadd.f32 %v733, %v742
    %v751 = vadd.f32 %v734, %v743
    %v752 = vadd.f32 %v735, %v744
    %v753 = vadd.f32 %v736, %v745
    %v754 = vadd.f32 %v737, %v746
    %v755 = vadd.f32 %v738, %v747
    %v756 = vadd.f32 %v739, %v748
    %v757 = vstv %s122
    %v758 = vadd.f32 %v749, %v757
    %v759 = vadd.f32 %v750, %v757
    %v760 = vadd.f32 %v751, %v757
    %v761 = vadd.f32 %v752, %v757
    %v762 = vadd.f32 %v753, %v757
    %v763 = vadd.f32 %v754, %v757
    %v764 = vadd.f32 %v755, %v757
    %v765 = vadd.f32 %v756, %v757
    %v766 = vtanh.pop %v758
    %v767 = vtanh.pop %v759
    %v768 = vtanh.pop %v760
    %v769 = vtanh.pop %v761
    %v770 = vtanh.pop %v762
    %v771 = vtanh.pop %v763
    %v772 = vtanh.pop %v764
    %v773 = vtanh.pop %v765
    %v774 = vstv %s138
    %v775 = vmul.f32 %v774, %v766
    %v776 = vmul.f32 %v774, %v767
    %v777 = vmul.f32 %v774, %v768
    %v778 = vmul.f32 %v774, %v769
    %v779 = vmul.f32 %v774, %v770
    %v780 = vmul.f32 %v774, %v771
    %v781 = vmul.f32 %v774, %v772
    %v782 = vmul.f32 %v774, %v773
    %v783 = vadd.f32 %v723, %v775
    %v784 = vadd.f32 %v724, %v776
    %v785 = vadd.f32 %v725, %v777
    %v786 = vadd.f32 %v726, %v778
    %v787 = vadd.f32 %v727, %v779
    %v788 = vadd.f32 %v728, %v780
    %v789 = vadd.f32 %v729, %v781
    %v790 = vadd.f32 %v730, %v782
    %v791 = vstv %s91
    %v792 = vmul.f32 %v791, %v210
    %v793 = vmul.f32 %v791, %v222
    %v794 = vmul.f32 %v791, %v234
    %v795 = vmul.f32 %v791, %v246
    %v796 = vmul.f32 %v791, %v258
    %v797 = vmul.f32 %v791, %v270
    %v798 = vmul.f32 %v791, %v282
    %v799 = vmul.f32 %v791, %v294
    %v800 = vstv %s107
    %v801 = vmul.f32 %v800, %v671
    %v802 = vmul.f32 %v800, %v672
    %v803 = vmul.f32 %v800, %v673
    %v804 = vmul.f32 %v800, %v674
    %v805 = vmul.f32 %v800, %v675
    %v806 = vmul.f32 %v800, %v676
    %v807 = vmul.f32 %v800, %v677
    %v808 = vmul.f32 %v800, %v678
    %v809 = vadd.f32 %v792, %v801
    %v810 = vadd.f32 %v793, %v802
    %v811 = vadd.f32 %v794, %v803
    %v812 = vadd.f32 %v795, %v804
    %v813 = vadd.f32 %v796, %v805
    %v814 = vadd.f32 %v797, %v806
    %v815 = vadd.f32 %v798, %v807
    %v816 = vadd.f32 %v799, %v808
    %v817 = vstv %s123
    %v818 = vadd.f32 %v809, %v817
    %v819 = vadd.f32 %v810, %v817
    %v820 = vadd.f32 %v811, %v817
    %v821 = vadd.f32 %v812, %v817
    %v822 = vadd.f32 %v813, %v817
    %v823 = vadd.f32 %v814, %v817
    %v824 = vadd.f32 %v815, %v817
    %v825 = vadd.f32 %v816, %v817
    %v826 = vtanh.pop %v818
    %v827 = vtanh.pop %v819
    %v828 = vtanh.pop %v820
    %v829 = vtanh.pop %v821
    %v830 = vtanh.pop %v822
    %v831 = vtanh.pop %v823
    %v832 = vtanh.pop %v824
    %v833 = vtanh.pop %v825
    %v834 = vstv %s139
    %v835 = vmul.f32 %v834, %v826
    %v836 = vmul.f32 %v834, %v827
    %v837 = vmul.f32 %v834, %v828
    %v838 = vmul.f32 %v834, %v829
    %v839 = vmul.f32 %v834, %v830
    %v840 = vmul.f32 %v834, %v831
    %v841 = vmul.f32 %v834, %v832
    %v842 = vmul.f32 %v834, %v833
    %v843 = vadd.f32 %v783, %v835
    %v844 = vadd.f32 %v784, %v836
    %v845 = vadd.f32 %v785, %v837
    %v846 = vadd.f32 %v786, %v838
    %v847 = vadd.f32 %v787, %v839
    %v848 = vadd.f32 %v788, %v840
    %v849 = vadd.f32 %v789, %v841
    %v850 = vadd.f32 %v790, %v842
    %v851 = vstv %s92
    %v852 = vmul.f32 %v851, %v210
    %v853 = vmul.f32 %v851, %v222
    %v854 = vmul.f32 %v851, %v234
    %v855 = vmul.f32 %v851, %v246
    %v856 = vmul.f32 %v851, %v258
    %v857 = vmul.f32 %v851, %v270
    %v858 = vmul.f32 %v851, %v282
    %v859 = vmul.f32 %v851, %v294
    %v860 = vstv %s108
    %v861 = vmul.f32 %v860, %v671
    %v862 = vmul.f32 %v860, %v672
    %v863 = vmul.f32 %v860, %v673
    %v864 = vmul.f32 %v860, %v674
    %v865 = vmul.f32 %v860, %v675
    %v866 = vmul.f32 %v860, %v676
    %v867 = vmul.f32 %v860, %v677
    %v868 = vmul.f32 %v860, %v678
    %v869 = vadd.f32 %v852, %v861
    %v870 = vadd.f32 %v853, %v862
    %v871 = vadd.f32 %v854, %v863
    %v872 = vadd.f32 %v855, %v864
    %v873 = vadd.f32 %v856, %v865
    %v874 = vadd.f32 %v857, %v866
    %v875 = vadd.f32 %v858, %v867
    %v876 = vadd.f32 %v859, %v868
    %v877 = vstv %s124
    %v878 = vadd.f32 %v869, %v877
    %v879 = vadd.f32 %v870, %v877
    %v880 = vadd.f32 %v871, %v877
    %v881 = vadd.f32 %v872, %v877
    %v882 = vadd.f32 %v873, %v877
    %v883 = vadd.f32 %v874, %v877
    %v884 = vadd.f32 %v875, %v877
    %v885 = vadd.f32 %v876, %v877
    %v886 = vtanh.pop %v878
    %v887 = vtanh.pop %v879
    %v888 = vtanh.pop %v880
    %v889 = vtanh.pop %v881
    %v890 = vtanh.pop %v882
    %v891 = vtanh.pop %v883
    %v892 = vtanh.pop %v884
    %v893 = vtanh.pop %v885
    %v894 = vstv %s140
    %v895 = vmul.f32 %v894, %v886
    %v896 = vmul.f32 %v894, %v887
    %v897 = vmul.f32 %v894, %v888
    %v898 = vmul.f32 %v894, %v889
    %v899 = vmul.f32 %v894, %v890
    %v900 = vmul.f32 %v894, %v891
    %v901 = vmul.f32 %v894, %v892
    %v902 = vmul.f32 %v894, %v893
    %v903 = vadd.f32 %v843, %v895
    %v904 = vadd.f32 %v844, %v896
    %v905 = vadd.f32 %v845, %v897
    %v906 = vadd.f32 %v846, %v898
    %v907 = vadd.f32 %v847, %v899
    %v908 = vadd.f32 %v848, %v900
    %v909 = vadd.f32 %v849, %v901
    %v910 = vadd.f32 %v850, %v902
    %v911 = vstv %s93
    %v912 = vmul.f32 %v911, %v210
    %v913 = vmul.f32 %v911, %v222
    %v914 = vmul.f32 %v911, %v234
    %v915 = vmul.f32 %v911, %v246
    %v916 = vmul.f32 %v911, %v258
    %v917 = vmul.f32 %v911, %v270
    %v918 = vmul.f32 %v911, %v282
    %v919 = vmul.f32 %v911, %v294
    %v920 = vstv %s109
    %v921 = vmul.f32 %v920, %v671
    %v922 = vmul.f32 %v920, %v672
    %v923 = vmul.f32 %v920, %v673
    %v924 = vmul.f32 %v920, %v674
    %v925 = vmul.f32 %v920, %v675
    %v926 = vmul.f32 %v920, %v676
    %v927 = vmul.f32 %v920, %v677
    %v928 = vmul.f32 %v920, %v678
    %v929 = vadd.f32 %v912, %v921
    %v930 = vadd.f32 %v913, %v922
    %v931 = vadd.f32 %v914, %v923
    %v932 = vadd.f32 %v915, %v924
    %v933 = vadd.f32 %v916, %v925
    %v934 = vadd.f32 %v917, %v926
    %v935 = vadd.f32 %v918, %v927
    %v936 = vadd.f32 %v919, %v928
    %v937 = vstv %s125
    %v938 = vadd.f32 %v929, %v937
    %v939 = vadd.f32 %v930, %v937
    %v940 = vadd.f32 %v931, %v937
    %v941 = vadd.f32 %v932, %v937
    %v942 = vadd.f32 %v933, %v937
    %v943 = vadd.f32 %v934, %v937
    %v944 = vadd.f32 %v935, %v937
    %v945 = vadd.f32 %v936, %v937
    %v946 = vtanh.pop %v938
    %v947 = vtanh.pop %v939
    %v948 = vtanh.pop %v940
    %v949 = vtanh.pop %v941
    %v950 = vtanh.pop %v942
    %v951 = vtanh.pop %v943
    %v952 = vtanh.pop %v944
    %v953 = vtanh.pop %v945
    %v954 = vstv %s141
    %v955 = vmul.f32 %v954, %v946
    %v956 = vmul.f32 %v954, %v947
    %v957 = vmul.f32 %v954, %v948
    %v958 = vmul.f32 %v954, %v949
    %v959 = vmul.f32 %v954, %v950
    %v960 = vmul.f32 %v954, %v951
    %v961 = vmul.f32 %v954, %v952
    %v962 = vmul.f32 %v954, %v953
    %v963 = vadd.f32 %v903, %v955
    %v964 = vadd.f32 %v904, %v956
    %v965 = vadd.f32 %v905, %v957
    %v966 = vadd.f32 %v906, %v958
    %v967 = vadd.f32 %v907, %v959
    %v968 = vadd.f32 %v908, %v960
    %v969 = vadd.f32 %v909, %v961
    %v970 = vadd.f32 %v910, %v962
    %v971 = vstv %s94
    %v972 = vmul.f32 %v971, %v210
    %v973 = vmul.f32 %v971, %v222
    %v974 = vmul.f32 %v971, %v234
    %v975 = vmul.f32 %v971, %v246
    %v976 = vmul.f32 %v971, %v258
    %v977 = vmul.f32 %v971, %v270
    %v978 = vmul.f32 %v971, %v282
    %v979 = vmul.f32 %v971, %v294
    %v980 = vstv %s110
    %v981 = vmul.f32 %v980, %v671
    %v982 = vmul.f32 %v980, %v672
    %v983 = vmul.f32 %v980, %v673
    %v984 = vmul.f32 %v980, %v674
    %v985 = vmul.f32 %v980, %v675
    %v986 = vmul.f32 %v980, %v676
    %v987 = vmul.f32 %v980, %v677
    %v988 = vmul.f32 %v980, %v678
    %v989 = vadd.f32 %v972, %v981
    %v990 = vadd.f32 %v973, %v982
    %v991 = vadd.f32 %v974, %v983
    %v992 = vadd.f32 %v975, %v984
    %v993 = vadd.f32 %v976, %v985
    %v994 = vadd.f32 %v977, %v986
    %v995 = vadd.f32 %v978, %v987
    %v996 = vadd.f32 %v979, %v988
    %v997 = vstv %s126
    %v998 = vadd.f32 %v989, %v997
    %v999 = vadd.f32 %v990, %v997
    %v1000 = vadd.f32 %v991, %v997
    %v1001 = vadd.f32 %v992, %v997
    %v1002 = vadd.f32 %v993, %v997
    %v1003 = vadd.f32 %v994, %v997
    %v1004 = vadd.f32 %v995, %v997
    %v1005 = vadd.f32 %v996, %v997
    %v1006 = vtanh.pop %v998
    %v1007 = vtanh.pop %v999
    %v1008 = vtanh.pop %v1000
    %v1009 = vtanh.pop %v1001
    %v1010 = vtanh.pop %v1002
    %v1011 = vtanh.pop %v1003
    %v1012 = vtanh.pop %v1004
    %v1013 = vtanh.pop %v1005
    %v1014 = vstv %s142
    %v1015 = vmul.f32 %v1014, %v1006
    %v1016 = vmul.f32 %v1014, %v1007
    %v1017 = vmul.f32 %v1014, %v1008
    %v1018 = vmul.f32 %v1014, %v1009
    %v1019 = vmul.f32 %v1014, %v1010
    %v1020 = vmul.f32 %v1014, %v1011
    %v1021 = vmul.f32 %v1014, %v1012
    %v1022 = vmul.f32 %v1014, %v1013
    %v1023 = vadd.f32 %v963, %v1015
    %v1024 = vadd.f32 %v964, %v1016
    %v1025 = vadd.f32 %v965, %v1017
    %v1026 = vadd.f32 %v966, %v1018
    %v1027 = vadd.f32 %v967, %v1019
    %v1028 = vadd.f32 %v968, %v1020
    %v1029 = vadd.f32 %v969, %v1021
    %v1030 = vadd.f32 %v970, %v1022
    %v1031 = vstv %s95
    %v1032 = vmul.f32 %v1031, %v210
    %v1033 = vmul.f32 %v1031, %v222
    %v1034 = vmul.f32 %v1031, %v234
    %v1035 = vmul.f32 %v1031, %v246
    %v1036 = vmul.f32 %v1031, %v258
    %v1037 = vmul.f32 %v1031, %v270
    %v1038 = vmul.f32 %v1031, %v282
    %v1039 = vmul.f32 %v1031, %v294
    %v1040 = vstv %s111
    %v1041 = vmul.f32 %v1040, %v671
    %v1042 = vmul.f32 %v1040, %v672
    %v1043 = vmul.f32 %v1040, %v673
    %v1044 = vmul.f32 %v1040, %v674
    %v1045 = vmul.f32 %v1040, %v675
    %v1046 = vmul.f32 %v1040, %v676
    %v1047 = vmul.f32 %v1040, %v677
    %v1048 = vmul.f32 %v1040, %v678
    %v1049 = vadd.f32 %v1032, %v1041
    %v1050 = vadd.f32 %v1033, %v1042
    %v1051 = vadd.f32 %v1034, %v1043
    %v1052 = vadd.f32 %v1035, %v1044
    %v1053 = vadd.f32 %v1036, %v1045
    %v1054 = vadd.f32 %v1037, %v1046
    %v1055 = vadd.f32 %v1038, %v1047
    %v1056 = vadd.f32 %v1039, %v1048
    %v1057 = vstv %s127
    %v1058 = vadd.f32 %v1049, %v1057
    %v1059 = vadd.f32 %v1050, %v1057
    %v1060 = vadd.f32 %v1051, %v1057
    %v1061 = vadd.f32 %v1052, %v1057
    %v1062 = vadd.f32 %v1053, %v1057
    %v1063 = vadd.f32 %v1054, %v1057
    %v1064 = vadd.f32 %v1055, %v1057
    %v1065 = vadd.f32 %v1056, %v1057
    %v1066 = vtanh.pop %v1058
    %v1067 = vtanh.pop %v1059
    %v1068 = vtanh.pop %v1060
    %v1069 = vtanh.pop %v1061
    %v1070 = vtanh.pop %v1062
    %v1071 = vtanh.pop %v1063
    %v1072 = vtanh.pop %v1064
    %v1073 = vtanh.pop %v1065
    %v1074 = vstv %s143
    %v1075 = vmul.f32 %v1074, %v1066
    %v1076 = vmul.f32 %v1074, %v1067
    %v1077 = vmul.f32 %v1074, %v1068
    %v1078 = vmul.f32 %v1074, %v1069
    %v1079 = vmul.f32 %v1074, %v1070
    %v1080 = vmul.f32 %v1074, %v1071
    %v1081 = vmul.f32 %v1074, %v1072
    %v1082 = vmul.f32 %v1074, %v1073
    %v1083 = vadd.f32 %v1023, %v1075
    %v1084 = vadd.f32 %v1024, %v1076
    %v1085 = vadd.f32 %v1025, %v1077
    %v1086 = vadd.f32 %v1026, %v1078
    %v1087 = vadd.f32 %v1027, %v1079
    %v1088 = vadd.f32 %v1028, %v1080
    %v1089 = vadd.f32 %v1029, %v1081
    %v1090 = vadd.f32 %v1030, %v1082
    %v1091 = vstv %s96
    %v1092 = vmul.f32 %v1091, %v210
    %v1093 = vmul.f32 %v1091, %v222
    %v1094 = vmul.f32 %v1091, %v234
    %v1095 = vmul.f32 %v1091, %v246
    %v1096 = vmul.f32 %v1091, %v258
    %v1097 = vmul.f32 %v1091, %v270
    %v1098 = vmul.f32 %v1091, %v282
    %v1099 = vmul.f32 %v1091, %v294
    %v1100 = vstv %s112
    %v1101 = vmul.f32 %v1100, %v671
    %v1102 = vmul.f32 %v1100, %v672
    %v1103 = vmul.f32 %v1100, %v673
    %v1104 = vmul.f32 %v1100, %v674
    %v1105 = vmul.f32 %v1100, %v675
    %v1106 = vmul.f32 %v1100, %v676
    %v1107 = vmul.f32 %v1100, %v677
    %v1108 = vmul.f32 %v1100, %v678
    %v1109 = vadd.f32 %v1092, %v1101
    %v1110 = vadd.f32 %v1093, %v1102
    %v1111 = vadd.f32 %v1094, %v1103
    %v1112 = vadd.f32 %v1095, %v1104
    %v1113 = vadd.f32 %v1096, %v1105
    %v1114 = vadd.f32 %v1097, %v1106
    %v1115 = vadd.f32 %v1098, %v1107
    %v1116 = vadd.f32 %v1099, %v1108
    %v1117 = vstv %s128
    %v1118 = vadd.f32 %v1109, %v1117
    %v1119 = vadd.f32 %v1110, %v1117
    %v1120 = vadd.f32 %v1111, %v1117
    %v1121 = vadd.f32 %v1112, %v1117
    %v1122 = vadd.f32 %v1113, %v1117
    %v1123 = vadd.f32 %v1114, %v1117
    %v1124 = vadd.f32 %v1115, %v1117
    %v1125 = vadd.f32 %v1116, %v1117
    %v1126 = vtanh.pop %v1118
    %v1127 = vtanh.pop %v1119
    %v1128 = vtanh.pop %v1120
    %v1129 = vtanh.pop %v1121
    %v1130 = vtanh.pop %v1122
    %v1131 = vtanh.pop %v1123
    %v1132 = vtanh.pop %v1124
    %v1133 = vtanh.pop %v1125
    %v1134 = vstv %s144
    %v1135 = vmul.f32 %v1134, %v1126
    %v1136 = vmul.f32 %v1134, %v1127
    %v1137 = vmul.f32 %v1134, %v1128
    %v1138 = vmul.f32 %v1134, %v1129
    %v1139 = vmul.f32 %v1134, %v1130
    %v1140 = vmul.f32 %v1134, %v1131
    %v1141 = vmul.f32 %v1134, %v1132
    %v1142 = vmul.f32 %v1134, %v1133
    %v1143 = vadd.f32 %v1083, %v1135
    %v1144 = vadd.f32 %v1084, %v1136
    %v1145 = vadd.f32 %v1085, %v1137
    %v1146 = vadd.f32 %v1086, %v1138
    %v1147 = vadd.f32 %v1087, %v1139
    %v1148 = vadd.f32 %v1088, %v1140
    %v1149 = vadd.f32 %v1089, %v1141
    %v1150 = vadd.f32 %v1090, %v1142
    %v1151 = vstv %s97
    %v1152 = vmul.f32 %v1151, %v210
    %v1153 = vmul.f32 %v1151, %v222
    %v1154 = vmul.f32 %v1151, %v234
    %v1155 = vmul.f32 %v1151, %v246
    %v1156 = vmul.f32 %v1151, %v258
    %v1157 = vmul.f32 %v1151, %v270
    %v1158 = vmul.f32 %v1151, %v282
    %v1159 = vmul.f32 %v1151, %v294
    %v1160 = vstv %s113
    %v1161 = vmul.f32 %v1160, %v671
    %v1162 = vmul.f32 %v1160, %v672
    %v1163 = vmul.f32 %v1160, %v673
    %v1164 = vmul.f32 %v1160, %v674
    %v1165 = vmul.f32 %v1160, %v675
    %v1166 = vmul.f32 %v1160, %v676
    %v1167 = vmul.f32 %v1160, %v677
    %v1168 = vmul.f32 %v1160, %v678
    %v1169 = vadd.f32 %v1152, %v1161
    %v1170 = vadd.f32 %v1153, %v1162
    %v1171 = vadd.f32 %v1154, %v1163
    %v1172 = vadd.f32 %v1155, %v1164
    %v1173 = vadd.f32 %v1156, %v1165
    %v1174 = vadd.f32 %v1157, %v1166
    %v1175 = vadd.f32 %v1158, %v1167
    %v1176 = vadd.f32 %v1159, %v1168
    %v1177 = vstv %s129
    %v1178 = vadd.f32 %v1169, %v1177
    %v1179 = vadd.f32 %v1170, %v1177
    %v1180 = vadd.f32 %v1171, %v1177
    %v1181 = vadd.f32 %v1172, %v1177
    %v1182 = vadd.f32 %v1173, %v1177
    %v1183 = vadd.f32 %v1174, %v1177
    %v1184 = vadd.f32 %v1175, %v1177
    %v1185 = vadd.f32 %v1176, %v1177
    %v1186 = vtanh.pop %v1178
    %v1187 = vtanh.pop %v1179
    %v1188 = vtanh.pop %v1180
    %v1189 = vtanh.pop %v1181
    %v1190 = vtanh.pop %v1182
    %v1191 = vtanh.pop %v1183
    %v1192 = vtanh.pop %v1184
    %v1193 = vtanh.pop %v1185
    %v1194 = vstv %s145
    %v1195 = vmul.f32 %v1194, %v1186
    %v1196 = vmul.f32 %v1194, %v1187
    %v1197 = vmul.f32 %v1194, %v1188
    %v1198 = vmul.f32 %v1194, %v1189
    %v1199 = vmul.f32 %v1194, %v1190
    %v1200 = vmul.f32 %v1194, %v1191
    %v1201 = vmul.f32 %v1194, %v1192
    %v1202 = vmul.f32 %v1194, %v1193
    %v1203 = vadd.f32 %v1143, %v1195
    %v1204 = vadd.f32 %v1144, %v1196
    %v1205 = vadd.f32 %v1145, %v1197
    %v1206 = vadd.f32 %v1146, %v1198
    %v1207 = vadd.f32 %v1147, %v1199
    %v1208 = vadd.f32 %v1148, %v1200
    %v1209 = vadd.f32 %v1149, %v1201
    %v1210 = vadd.f32 %v1150, %v1202
    %v1211 = vstv %s98
    %v1212 = vmul.f32 %v1211, %v210
    %v1213 = vmul.f32 %v1211, %v222
    %v1214 = vmul.f32 %v1211, %v234
    %v1215 = vmul.f32 %v1211, %v246
    %v1216 = vmul.f32 %v1211, %v258
    %v1217 = vmul.f32 %v1211, %v270
    %v1218 = vmul.f32 %v1211, %v282
    %v1219 = vmul.f32 %v1211, %v294
    %v1220 = vstv %s114
    %v1221 = vmul.f32 %v1220, %v671
    %v1222 = vmul.f32 %v1220, %v672
    %v1223 = vmul.f32 %v1220, %v673
    %v1224 = vmul.f32 %v1220, %v674
    %v1225 = vmul.f32 %v1220, %v675
    %v1226 = vmul.f32 %v1220, %v676
    %v1227 = vmul.f32 %v1220, %v677
    %v1228 = vmul.f32 %v1220, %v678
    %v1229 = vadd.f32 %v1212, %v1221
    %v1230 = vadd.f32 %v1213, %v1222
    %v1231 = vadd.f32 %v1214, %v1223
    %v1232 = vadd.f32 %v1215, %v1224
    %v1233 = vadd.f32 %v1216, %v1225
    %v1234 = vadd.f32 %v1217, %v1226
    %v1235 = vadd.f32 %v1218, %v1227
    %v1236 = vadd.f32 %v1219, %v1228
    %v1237 = vstv %s130
    %v1238 = vadd.f32 %v1229, %v1237
    %v1239 = vadd.f32 %v1230, %v1237
    %v1240 = vadd.f32 %v1231, %v1237
    %v1241 = vadd.f32 %v1232, %v1237
    %v1242 = vadd.f32 %v1233, %v1237
    %v1243 = vadd.f32 %v1234, %v1237
    %v1244 = vadd.f32 %v1235, %v1237
    %v1245 = vadd.f32 %v1236, %v1237
    %v1246 = vtanh.pop %v1238
    %v1247 = vtanh.pop %v1239
    %v1248 = vtanh.pop %v1240
    %v1249 = vtanh.pop %v1241
    %v1250 = vtanh.pop %v1242
    %v1251 = vtanh.pop %v1243
    %v1252 = vtanh.pop %v1244
    %v1253 = vtanh.pop %v1245
    %v1254 = vstv %s146
    %v1255 = vmul.f32 %v1254, %v1246
    %v1256 = vmul.f32 %v1254, %v1247
    %v1257 = vmul.f32 %v1254, %v1248
    %v1258 = vmul.f32 %v1254, %v1249
    %v1259 = vmul.f32 %v1254, %v1250
    %v1260 = vmul.f32 %v1254, %v1251
    %v1261 = vmul.f32 %v1254, %v1252
    %v1262 = vmul.f32 %v1254, %v1253
    %v1263 = vadd.f32 %v1203, %v1255
    %v1264 = vadd.f32 %v1204, %v1256
    %v1265 = vadd.f32 %v1205, %v1257
    %v1266 = vadd.f32 %v1206, %v1258
    %v1267 = vadd.f32 %v1207, %v1259
    %v1268 = vadd.f32 %v1208, %v1260
    %v1269 = vadd.f32 %v1209, %v1261
    %v1270 = vadd.f32 %v1210, %v1262
    %v1271 = vstv %s99
    %v1272 = vmul.f32 %v1271, %v210
    %v1273 = vmul.f32 %v1271, %v222
    %v1274 = vmul.f32 %v1271, %v234
    %v1275 = vmul.f32 %v1271, %v246
    %v1276 = vmul.f32 %v1271, %v258
    %v1277 = vmul.f32 %v1271, %v270
    %v1278 = vmul.f32 %v1271, %v282
    %v1279 = vmul.f32 %v1271, %v294
    %v1280 = vstv %s115
    %v1281 = vmul.f32 %v1280, %v671
    %v1282 = vmul.f32 %v1280, %v672
    %v1283 = vmul.f32 %v1280, %v673
    %v1284 = vmul.f32 %v1280, %v674
    %v1285 = vmul.f32 %v1280, %v675
    %v1286 = vmul.f32 %v1280, %v676
    %v1287 = vmul.f32 %v1280, %v677
    %v1288 = vmul.f32 %v1280, %v678
    %v1289 = vadd.f32 %v1272, %v1281
    %v1290 = vadd.f32 %v1273, %v1282
    %v1291 = vadd.f32 %v1274, %v1283
    %v1292 = vadd.f32 %v1275, %v1284
    %v1293 = vadd.f32 %v1276, %v1285
    %v1294 = vadd.f32 %v1277, %v1286
    %v1295 = vadd.f32 %v1278, %v1287
    %v1296 = vadd.f32 %v1279, %v1288
    %v1297 = vstv %s131
    %v1298 = vadd.f32 %v1289, %v1297
    %v1299 = vadd.f32 %v1290, %v1297
    %v1300 = vadd.f32 %v1291, %v1297
    %v1301 = vadd.f32 %v1292, %v1297
    %v1302 = vadd.f32 %v1293, %v1297
    %v1303 = vadd.f32 %v1294, %v1297
    %v1304 = vadd.f32 %v1295, %v1297
    %v1305 = vadd.f32 %v1296, %v1297
    %v1306 = vtanh.pop %v1298
    %v1307 = vtanh.pop %v1299
    %v1308 = vtanh.pop %v1300
    %v1309 = vtanh.pop %v1301
    %v1310 = vtanh.pop %v1302
    %v1311 = vtanh.pop %v1303
    %v1312 = vtanh.pop %v1304
    %v1313 = vtanh.pop %v1305
    %v1314 = vstv %s147
    %v1315 = vmul.f32 %v1314, %v1306
    %v1316 = vmul.f32 %v1314, %v1307
    %v1317 = vmul.f32 %v1314, %v1308
    %v1318 = vmul.f32 %v1314, %v1309
    %v1319 = vmul.f32 %v1314, %v1310
    %v1320 = vmul.f32 %v1314, %v1311
    %v1321 = vmul.f32 %v1314, %v1312
    %v1322 = vmul.f32 %v1314, %v1313
    %v1323 = vadd.f32 %v1263, %v1315
    %v1324 = vadd.f32 %v1264, %v1316
    %v1325 = vadd.f32 %v1265, %v1317
    %v1326 = vadd.f32 %v1266, %v1318
    %v1327 = vadd.f32 %v1267, %v1319
    %v1328 = vadd.f32 %v1268, %v1320
    %v1329 = vadd.f32 %v1269, %v1321
    %v1330 = vadd.f32 %v1270, %v1322
    %v1331 = vstv %s100
    %v1332 = vmul.f32 %v1331, %v210
    %v1333 = vmul.f32 %v1331, %v222
    %v1334 = vmul.f32 %v1331, %v234
    %v1335 = vmul.f32 %v1331, %v246
    %v1336 = vmul.f32 %v1331, %v258
    %v1337 = vmul.f32 %v1331, %v270
    %v1338 = vmul.f32 %v1331, %v282
    %v1339 = vmul.f32 %v1331, %v294
    %v1340 = vstv %s116
    %v1341 = vmul.f32 %v1340, %v671
    %v1342 = vmul.f32 %v1340, %v672
    %v1343 = vmul.f32 %v1340, %v673
    %v1344 = vmul.f32 %v1340, %v674
    %v1345 = vmul.f32 %v1340, %v675
    %v1346 = vmul.f32 %v1340, %v676
    %v1347 = vmul.f32 %v1340, %v677
    %v1348 = vmul.f32 %v1340, %v678
    %v1349 = vadd.f32 %v1332, %v1341
    %v1350 = vadd.f32 %v1333, %v1342
    %v1351 = vadd.f32 %v1334, %v1343
    %v1352 = vadd.f32 %v1335, %v1344
    %v1353 = vadd.f32 %v1336, %v1345
    %v1354 = vadd.f32 %v1337, %v1346
    %v1355 = vadd.f32 %v1338, %v1347
    %v1356 = vadd.f32 %v1339, %v1348
    %v1357 = vstv %s132
    %v1358 = vadd.f32 %v1349, %v1357
    %v1359 = vadd.f32 %v1350, %v1357
    %v1360 = vadd.f32 %v1351, %v1357
    %v1361 = vadd.f32 %v1352, %v1357
    %v1362 = vadd.f32 %v1353, %v1357
    %v1363 = vadd.f32 %v1354, %v1357
    %v1364 = vadd.f32 %v1355, %v1357
    %v1365 = vadd.f32 %v1356, %v1357
    %v1366 = vtanh.pop %v1358
    %v1367 = vtanh.pop %v1359
    %v1368 = vtanh.pop %v1360
    %v1369 = vtanh.pop %v1361
    %v1370 = vtanh.pop %v1362
    %v1371 = vtanh.pop %v1363
    %v1372 = vtanh.pop %v1364
    %v1373 = vtanh.pop %v1365
    %v1374 = vstv %s148
    %v1375 = vmul.f32 %v1374, %v1366
    %v1376 = vmul.f32 %v1374, %v1367
    %v1377 = vmul.f32 %v1374, %v1368
    %v1378 = vmul.f32 %v1374, %v1369
    %v1379 = vmul.f32 %v1374, %v1370
    %v1380 = vmul.f32 %v1374, %v1371
    %v1381 = vmul.f32 %v1374, %v1372
    %v1382 = vmul.f32 %v1374, %v1373
    %v1383 = vadd.f32 %v1323, %v1375
    %v1384 = vadd.f32 %v1324, %v1376
    %v1385 = vadd.f32 %v1325, %v1377
    %v1386 = vadd.f32 %v1326, %v1378
    %v1387 = vadd.f32 %v1327, %v1379
    %v1388 = vadd.f32 %v1328, %v1380
    %v1389 = vadd.f32 %v1329, %v1381
    %v1390 = vadd.f32 %v1330, %v1382
    %v1391 = vstv %s101
    %v1392 = vmul.f32 %v1391, %v210
    %v1393 = vmul.f32 %v1391, %v222
    %v1394 = vmul.f32 %v1391, %v234
    %v1395 = vmul.f32 %v1391, %v246
    %v1396 = vmul.f32 %v1391, %v258
    %v1397 = vmul.f32 %v1391, %v270
    %v1398 = vmul.f32 %v1391, %v282
    %v1399 = vmul.f32 %v1391, %v294
    %v1400 = vstv %s117
    %v1401 = vmul.f32 %v1400, %v671
    %v1402 = vmul.f32 %v1400, %v672
    %v1403 = vmul.f32 %v1400, %v673
    %v1404 = vmul.f32 %v1400, %v674
    %v1405 = vmul.f32 %v1400, %v675
    %v1406 = vmul.f32 %v1400, %v676
    %v1407 = vmul.f32 %v1400, %v677
    %v1408 = vmul.f32 %v1400, %v678
    %v1409 = vadd.f32 %v1392, %v1401
    %v1410 = vadd.f32 %v1393, %v1402
    %v1411 = vadd.f32 %v1394, %v1403
    %v1412 = vadd.f32 %v1395, %v1404
    %v1413 = vadd.f32 %v1396, %v1405
    %v1414 = vadd.f32 %v1397, %v1406
    %v1415 = vadd.f32 %v1398, %v1407
    %v1416 = vadd.f32 %v1399, %v1408
    %v1417 = vstv %s133
    %v1418 = vadd.f32 %v1409, %v1417
    %v1419 = vadd.f32 %v1410, %v1417
    %v1420 = vadd.f32 %v1411, %v1417
    %v1421 = vadd.f32 %v1412, %v1417
    %v1422 = vadd.f32 %v1413, %v1417
    %v1423 = vadd.f32 %v1414, %v1417
    %v1424 = vadd.f32 %v1415, %v1417
    %v1425 = vadd.f32 %v1416, %v1417
    %v1426 = vtanh.pop %v1418
    %v1427 = vtanh.pop %v1419
    %v1428 = vtanh.pop %v1420
    %v1429 = vtanh.pop %v1421
    %v1430 = vtanh.pop %v1422
    %v1431 = vtanh.pop %v1423
    %v1432 = vtanh.pop %v1424
    %v1433 = vtanh.pop %v1425
    %v1434 = vstv %s149
    %v1435 = vmul.f32 %v1434, %v1426
    %v1436 = vmul.f32 %v1434, %v1427
    %v1437 = vmul.f32 %v1434, %v1428
    %v1438 = vmul.f32 %v1434, %v1429
    %v1439 = vmul.f32 %v1434, %v1430
    %v1440 = vmul.f32 %v1434, %v1431
    %v1441 = vmul.f32 %v1434, %v1432
    %v1442 = vmul.f32 %v1434, %v1433
    %v1443 = vadd.f32 %v1383, %v1435
    %v1444 = vadd.f32 %v1384, %v1436
    %v1445 = vadd.f32 %v1385, %v1437
    %v1446 = vadd.f32 %v1386, %v1438
    %v1447 = vadd.f32 %v1387, %v1439
    %v1448 = vadd.f32 %v1388, %v1440
    %v1449 = vadd.f32 %v1389, %v1441
    %v1450 = vadd.f32 %v1390, %v1442
    %v1451 = vstv %s102
    %v1452 = vmul.f32 %v1451, %v210
    %v1453 = vmul.f32 %v1451, %v222
    %v1454 = vmul.f32 %v1451, %v234
    %v1455 = vmul.f32 %v1451, %v246
    %v1456 = vmul.f32 %v1451, %v258
    %v1457 = vmul.f32 %v1451, %v270
    %v1458 = vmul.f32 %v1451, %v282
    %v1459 = vmul.f32 %v1451, %v294
    %v1460 = vstv %s118
    %v1461 = vmul.f32 %v1460, %v671
    %v1462 = vmul.f32 %v1460, %v672
    %v1463 = vmul.f32 %v1460, %v673
    %v1464 = vmul.f32 %v1460, %v674
    %v1465 = vmul.f32 %v1460, %v675
    %v1466 = vmul.f32 %v1460, %v676
    %v1467 = vmul.f32 %v1460, %v677
    %v1468 = vmul.f32 %v1460, %v678
    %v1469 = vadd.f32 %v1452, %v1461
    %v1470 = vadd.f32 %v1453, %v1462
    %v1471 = vadd.f32 %v1454, %v1463
    %v1472 = vadd.f32 %v1455, %v1464
    %v1473 = vadd.f32 %v1456, %v1465
    %v1474 = vadd.f32 %v1457, %v1466
    %v1475 = vadd.f32 %v1458, %v1467
    %v1476 = vadd.f32 %v1459, %v1468
    %v1477 = vstv %s134
    %v1478 = vadd.f32 %v1469, %v1477
    %v1479 = vadd.f32 %v1470, %v1477
    %v1480 = vadd.f32 %v1471, %v1477
    %v1481 = vadd.f32 %v1472, %v1477
    %v1482 = vadd.f32 %v1473, %v1477
    %v1483 = vadd.f32 %v1474, %v1477
    %v1484 = vadd.f32 %v1475, %v1477
    %v1485 = vadd.f32 %v1476, %v1477
    %v1486 = vtanh.pop %v1478
    %v1487 = vtanh.pop %v1479
    %v1488 = vtanh.pop %v1480
    %v1489 = vtanh.pop %v1481
    %v1490 = vtanh.pop %v1482
    %v1491 = vtanh.pop %v1483
    %v1492 = vtanh.pop %v1484
    %v1493 = vtanh.pop %v1485
    %v1494 = vstv %s150
    %v1495 = vmul.f32 %v1494, %v1486
    %v1496 = vmul.f32 %v1494, %v1487
    %v1497 = vmul.f32 %v1494, %v1488
    %v1498 = vmul.f32 %v1494, %v1489
    %v1499 = vmul.f32 %v1494, %v1490
    %v1500 = vmul.f32 %v1494, %v1491
    %v1501 = vmul.f32 %v1494, %v1492
    %v1502 = vmul.f32 %v1494, %v1493
    %v1503 = vadd.f32 %v1443, %v1495
    %v1504 = vadd.f32 %v1444, %v1496
    %v1505 = vadd.f32 %v1445, %v1497
    %v1506 = vadd.f32 %v1446, %v1498
    %v1507 = vadd.f32 %v1447, %v1499
    %v1508 = vadd.f32 %v1448, %v1500
    %v1509 = vadd.f32 %v1449, %v1501
    %v1510 = vadd.f32 %v1450, %v1502
    %v1511 = vstv %s103
    %v1512 = vmul.f32 %v1511, %v210
    %v1513 = vmul.f32 %v1511, %v222
    %v1514 = vmul.f32 %v1511, %v234
    %v1515 = vmul.f32 %v1511, %v246
    %v1516 = vmul.f32 %v1511, %v258
    %v1517 = vmul.f32 %v1511, %v270
    %v1518 = vmul.f32 %v1511, %v282
    %v1519 = vmul.f32 %v1511, %v294
    %v1520 = vstv %s119
    %v1521 = vmul.f32 %v1520, %v671
    %v1522 = vmul.f32 %v1520, %v672
    %v1523 = vmul.f32 %v1520, %v673
    %v1524 = vmul.f32 %v1520, %v674
    %v1525 = vmul.f32 %v1520, %v675
    %v1526 = vmul.f32 %v1520, %v676
    %v1527 = vmul.f32 %v1520, %v677
    %v1528 = vmul.f32 %v1520, %v678
    %v1529 = vadd.f32 %v1512, %v1521
    %v1530 = vadd.f32 %v1513, %v1522
    %v1531 = vadd.f32 %v1514, %v1523
    %v1532 = vadd.f32 %v1515, %v1524
    %v1533 = vadd.f32 %v1516, %v1525
    %v1534 = vadd.f32 %v1517, %v1526
    %v1535 = vadd.f32 %v1518, %v1527
    %v1536 = vadd.f32 %v1519, %v1528
    %v1537 = vstv %s135
    %v1538 = vadd.f32 %v1529, %v1537
    %v1539 = vadd.f32 %v1530, %v1537
    %v1540 = vadd.f32 %v1531, %v1537
    %v1541 = vadd.f32 %v1532, %v1537
    %v1542 = vadd.f32 %v1533, %v1537
    %v1543 = vadd.f32 %v1534, %v1537
    %v1544 = vadd.f32 %v1535, %v1537
    %v1545 = vadd.f32 %v1536, %v1537
    %v1546 = vtanh.pop %v1538
    %v1547 = vtanh.pop %v1539
    %v1548 = vtanh.pop %v1540
    %v1549 = vtanh.pop %v1541
    %v1550 = vtanh.pop %v1542
    %v1551 = vtanh.pop %v1543
    %v1552 = vtanh.pop %v1544
    %v1553 = vtanh.pop %v1545
    %v1554 = vstv %s151
    %v1555 = vmul.f32 %v1554, %v1546
    %v1556 = vmul.f32 %v1554, %v1547
    %v1557 = vmul.f32 %v1554, %v1548
    %v1558 = vmul.f32 %v1554, %v1549
    %v1559 = vmul.f32 %v1554, %v1550
    %v1560 = vmul.f32 %v1554, %v1551
    %v1561 = vmul.f32 %v1554, %v1552
    %v1562 = vmul.f32 %v1554, %v1553
    %v1563 = vadd.f32 %v1503, %v1555
    %v1564 = vadd.f32 %v1504, %v1556
    %v1565 = vadd.f32 %v1505, %v1557
    %v1566 = vadd.f32 %v1506, %v1558
    %v1567 = vadd.f32 %v1507, %v1559
    %v1568 = vadd.f32 %v1508, %v1560
    %v1569 = vadd.f32 %v1509, %v1561
    %v1570 = vadd.f32 %v1510, %v1562
    %v1571 = vstv %s104
    %v1572 = vmul.f32 %v1571, %v210
    %v1573 = vmul.f32 %v1571, %v222
    %v1574 = vmul.f32 %v1571, %v234
    %v1575 = vmul.f32 %v1571, %v246
    %v1576 = vmul.f32 %v1571, %v258
    %v1577 = vmul.f32 %v1571, %v270
    %v1578 = vmul.f32 %v1571, %v282
    %v1579 = vmul.f32 %v1571, %v294
    %v1580 = vstv %s120
    %v1581 = vmul.f32 %v1580, %v671
    %v1582 = vmul.f32 %v1580, %v672
    %v1583 = vmul.f32 %v1580, %v673
    %v1584 = vmul.f32 %v1580, %v674
    %v1585 = vmul.f32 %v1580, %v675
    %v1586 = vmul.f32 %v1580, %v676
    %v1587 = vmul.f32 %v1580, %v677
    %v1588 = vmul.f32 %v1580, %v678
    %v1589 = vadd.f32 %v1572, %v1581
    %v1590 = vadd.f32 %v1573, %v1582
    %v1591 = vadd.f32 %v1574, %v1583
    %v1592 = vadd.f32 %v1575, %v1584
    %v1593 = vadd.f32 %v1576, %v1585
    %v1594 = vadd.f32 %v1577, %v1586
    %v1595 = vadd.f32 %v1578, %v1587
    %v1596 = vadd.f32 %v1579, %v1588
    %v1597 = vstv %s136
    %v1598 = vadd.f32 %v1589, %v1597
    %v1599 = vadd.f32 %v1590, %v1597
    %v1600 = vadd.f32 %v1591, %v1597
    %v1601 = vadd.f32 %v1592, %v1597
    %v1602 = vadd.f32 %v1593, %v1597
    %v1603 = vadd.f32 %v1594, %v1597
    %v1604 = vadd.f32 %v1595, %v1597
    %v1605 = vadd.f32 %v1596, %v1597
    %v1606 = vtanh.pop %v1598
    %v1607 = vtanh.pop %v1599
    %v1608 = vtanh.pop %v1600
    %v1609 = vtanh.pop %v1601
    %v1610 = vtanh.pop %v1602
    %v1611 = vtanh.pop %v1603
    %v1612 = vtanh.pop %v1604
    %v1613 = vtanh.pop %v1605
    %v1614 = vstv %s152
    %v1615 = vmul.f32 %v1614, %v1606
    %v1616 = vmul.f32 %v1614, %v1607
    %v1617 = vmul.f32 %v1614, %v1608
    %v1618 = vmul.f32 %v1614, %v1609
    %v1619 = vmul.f32 %v1614, %v1610
    %v1620 = vmul.f32 %v1614, %v1611
    %v1621 = vmul.f32 %v1614, %v1612
    %v1622 = vmul.f32 %v1614, %v1613
    %v1623 = vadd.f32 %v1563, %v1615
    %v1624 = vadd.f32 %v1564, %v1616
    %v1625 = vadd.f32 %v1565, %v1617
    %v1626 = vadd.f32 %v1566, %v1618
    %v1627 = vadd.f32 %v1567, %v1619
    %v1628 = vadd.f32 %v1568, %v1620
    %v1629 = vadd.f32 %v1569, %v1621
    %v1630 = vadd.f32 %v1570, %v1622
    %v1631 = vstv %s153
    %v1632 = vadd.f32 %v1623, %v1631
    %v1633 = vadd.f32 %v1624, %v1631
    %v1634 = vadd.f32 %v1625, %v1631
    %v1635 = vadd.f32 %v1626, %v1631
    %v1636 = vadd.f32 %v1627, %v1631
    %v1637 = vadd.f32 %v1628, %v1631
    %v1638 = vadd.f32 %v1629, %v1631
    %v1639 = vadd.f32 %v1630, %v1631
    %v1640 = vmul.f32 %v1632, 0.5
    %v1641 = vmul.f32 %v1633, 0.5
    %v1642 = vmul.f32 %v1634, 0.5
    %v1643 = vmul.f32 %v1635, 0.5
    %v1644 = vmul.f32 %v1636, 0.5
    %v1645 = vmul.f32 %v1637, 0.5
    %v1646 = vmul.f32 %v1638, 0.5
    %v1647 = vmul.f32 %v1639, 0.5
    %v1648 = vtanh.pop %v1640
    %v1649 = vtanh.pop %v1641
    %v1650 = vtanh.pop %v1642
    %v1651 = vtanh.pop %v1643
    %v1652 = vtanh.pop %v1644
    %v1653 = vtanh.pop %v1645
    %v1654 = vtanh.pop %v1646
    %v1655 = vtanh.pop %v1647
    %v1656 = vmul.f32 %v1648, 0.5
    %v1657 = vmul.f32 %v1649, 0.5
    %v1658 = vmul.f32 %v1650, 0.5
    %v1659 = vmul.f32 %v1651, 0.5
    %v1660 = vmul.f32 %v1652, 0.5
    %v1661 = vmul.f32 %v1653, 0.5
    %v1662 = vmul.f32 %v1654, 0.5
    %v1663 = vmul.f32 %v1655, 0.5
    %v1664 = vadd.f32 %v1656, 0.5
    %v1665 = vadd.f32 %v1657, 0.5
    %v1666 = vadd.f32 %v1658, 0.5
    %v1667 = vadd.f32 %v1659, 0.5
    %v1668 = vadd.f32 %v1660, 0.5
    %v1669 = vadd.f32 %v1661, 0.5
    %v1670 = vadd.f32 %v1662, 0.5
    %v1671 = vadd.f32 %v1663, 0.5
    %s1672 = smul.addr %s154, 8
    %s1673 = scalar_lea.vmem [#allocation13], %s1672
    %1674 = vst [vmem:[%s1673] sm:$0xff] %v1664
    %1675 = vst [vmem:[%s1673 + $0x8] sm:$0xff] %v1665
    %1676 = vst [vmem:[%s1673 + $0x10] sm:$0xff] %v1666
    %1677 = vst [vmem:[%s1673 + $0x18] sm:$0xff] %v1667
    %1678 = vst [vmem:[%s1673 + $0x20] sm:$0xff] %v1668
    %1679 = vst [vmem:[%s1673 + $0x28] sm:$0xff] %v1669
    %1680 = vst [vmem:[%s1673 + $0x30] sm:$0xff] %v1670
    %1681 = vst [vmem:[%s1673 + $0x38] sm:$0xff] %v1671
    // Predicated region
    $region46: #{tpu_custom_call.1} parent=1 // pred_check
      _
    $region47: #{tpu_custom_call.1} parent=1 // pred_check_branch
      %1683 = sbr.rel (0) target = $region49
    $region48: #{tpu_custom_call.1} parent=1 // pred_region
      %1685 = vsyncadd [#allocation5], 0
      %s1687 = sshll.u32 [#allocation13], 4
      %s1688 = int_to_ptr.vmem [resolvable:$true] %s1687
      %s1689 = sshll.u32 %s6, 4
      %s1690 = int_to_ptr.hbm [resolvable:$true] %s1689
      %1692 = dma.vmem_to_hbm [thread:$0]  %s1688, 1024, %s1690, [#allocation5]
    $region49: #{tpu_custom_call.1} parent=1 // pred_fallthru
      _
    // Predicated region
    $region50: #{tpu_custom_call.1} parent=1 // pred_check
      _
    $region51: #{tpu_custom_call.1} parent=1 // pred_check_branch
      %1694 = sbr.rel (0) target = $region53
    $region52: #{tpu_custom_call.1} parent=1 // pred_region
      %1696 = dma.done [#allocation5], 1024
    $region53: #{tpu_custom_call.1} parent=1 // pred_fallthru
      _
    %1697 = vsyncpa [#allocation4], 1
    %1698 = vsyncpa [#allocation12], 1
    %1699 = vsyncpa [#allocation5], 1
    %1700 = vsyncpa [#allocation6], 1
    %1701 = vsyncpa [#allocation8], 1

</llo_original>
